<compile_context>
chip_gen: v7x
topology: tpu7x:2x2x1
jax: 0.10.0
libtpu: 0.0.40
codegen_flags: <defaults>
</compile_context>

<pallas_src>
import functools

import jax
import jax.numpy as jnp
from jax.experimental import pallas as pl
from jax.experimental.pallas import tpu as pltpu

_DICE_EPS = 1e-8


# ----------------------------------------------------------------------------
# Generation-aware VMEM planning
# ----------------------------------------------------------------------------
def _vmem_plan():
    cap = 64 * 1024 * 1024  # conservative default = v7x physical VMEM
    try:
        info = pltpu.get_tpu_info()
        cap = int(getattr(info, "vmem_capacity_bytes", cap))
    except Exception:
        pass
    tile_budget = max(2 * 1024 * 1024, cap // 10)  # ~6.4 MiB (64 MiB) .. ~12.8 MiB (128 MiB)
    vmem_limit = (cap * 3) // 4                    # ~48 MiB (v7x) .. ~96 MiB (v5e/v6e)
    return tile_budget, vmem_limit


def _plan_batch_tiling(batch, per_batch_bytes_list, budget, unit):
    """Pick a padded batch size plus one batch-tile per pass.

    Tiles are multiples of `unit` (8 rows f32 / 16 rows bf16 sublane rule for the
    (TB, E) / (TR, 4E) / (TB, S) blocks) that divide the padded batch, chosen as
    large as the VMEM budget allows.  If `batch` is not a multiple of `unit` we
    either run a single full-extent tile (when it fits) or zero-pad the batch.
    """
    if batch % unit != 0:
        if all(batch * pbb <= budget for pbb in per_batch_bytes_list):
            return batch, [batch] * len(per_batch_bytes_list)
        batch_pad = ((batch + unit - 1) // unit) * unit
    else:
        batch_pad = batch
    tiles = []
    for pbb in per_batch_bytes_list:
        fit = max(1, budget // max(pbb, 1))
        tile = unit  # floor: smallest legal tile (always fits for sane shapes)
        for cand in range(unit, batch_pad + 1, unit):
            if batch_pad % cand == 0 and cand <= fit:
                tile = cand
        tiles.append(min(tile, batch_pad))
    return batch_pad, tiles


# ----------------------------------------------------------------------------
# Kernels
# ----------------------------------------------------------------------------
def _stats_kernel(hist4_ref, targ_ref, w1_ref, w1s_ref, sum_ref, ssq_ref, *, rpb):
    """Pass 1: per-tile partial sums of h0 = x @ w1 (bias folded out analytically).

    With the dim=0-concat block structure [t4, hg, t4-hg, t4*hg]:
        sum over the 4 blocks = 2*h_t + h_p
        ssq over the 4 blocks = 2*h_t^2 + 2*h_g^2 - 2*h_t*h_g + h_p^2
    Zero-padded batches contribute exactly zero (no bias), so the wrapper can
    divide by the real row count.
    """
    t = targ_ref[...]                                      # (TB, E)
    tb, e = t.shape
    tr = tb * rpb
    t_rows = jnp.broadcast_to(t[:, None, :], (tb, rpb, e)).reshape(tr, e)
    hg = hist4_ref[...]                                    # (TR, 4E)
    t4 = jnp.concatenate([t_rows] * 4, axis=-1)            # (TR, 4E), VMEM only

    h_t = jnp.dot(t_rows, w1s_ref[...], preferred_element_type=jnp.float32)
    h_g = jnp.dot(hg, w1_ref[...], preferred_element_type=jnp.float32)
    h_p = jnp.dot(t4 * hg, w1_ref[...], preferred_element_type=jnp.float32)

    s = jnp.sum(2.0 * h_t + h_p, axis=0, keepdims=True)
    q = jnp.sum(2.0 * h_t * h_t + 2.0 * h_g * h_g - 2.0 * h_t * h_g + h_p * h_p,
                axis=0, keepdims=True)
    sum_ref[...] = s[None]                                 # (1, 1, H) partial sums
    ssq_ref[...] = q[None]


def _logits_kernel(hist4_ref, targ_ref, w1_ref, w1s_ref, b1_ref, mean0_ref,
                   rstd_ref, w2row_ref, alpha_ref, b2_ref, logits_ref, *, rpb):
    """Pass 2: Linear1 + Dice + Linear2 for the 4 concat blocks of this tile."""
    t = targ_ref[...]                                      # (TB, E)
    tb, e = t.shape
    tr = tb * rpb
    t_rows = jnp.broadcast_to(t[:, None, :], (tb, rpb, e)).reshape(tr, e)
    hg = hist4_ref[...]                                    # (TR, 4E)
    t4 = jnp.concatenate([t_rows] * 4, axis=-1)

    h_t = jnp.dot(t_rows, w1s_ref[...], preferred_element_type=jnp.float32)
    h_g = jnp.dot(hg, w1_ref[...], preferred_element_type=jnp.float32)
    h_p = jnp.dot(t4 * hg, w1_ref[...], preferred_element_type=jnp.float32)

    b1 = b1_ref[...]                                       # (1, H)
    mean0 = mean0_ref[...]                                 # mean of h0 (no bias)
    rstd = rstd_ref[...]
    w2row = w2row_ref[...]
    alpha = alpha_ref[0, 0]                                # SMEM scalars
    b2 = b2_ref[0, 0]

    cols = []
    for h0 in (h_t, h_g, h_t - h_g, h_p):                  # the 4 cat(dim=0) blocks
        p = jax.nn.sigmoid((h0 - mean0) * rstd)            # bias cancels in (h - mean)
        hd = (p + alpha * (1.0 - p)) * (h0 + b1)
        # Linear(H -> 1) as a VPU multiply + lane reduce (not a lane-1 MXU matmul).
        cols.append(jnp.sum(hd * w2row, axis=-1, keepdims=True) + b2)
    logits_ref[...] = jnp.concatenate(cols, axis=-1)       # (TR, 4)


def _apply_kernel(w_ref, hist_ref, out_ref, *, use_softmax):
    """Pass 3: optional per-row softmax over S, then MXU S-contraction -> (TB, E)."""
    w = w_ref[...].astype(jnp.float32)                     # (TB, S)
    if use_softmax:
        m = jnp.max(w, axis=-1, keepdims=True)
        e = jnp.exp(w - m)
        w = e * pl.reciprocal(jnp.sum(e, axis=-1, keepdims=True), approx=True)
    h = hist_ref[...]                                      # (TB, S, E)
    out = jnp.einsum('bqs,bse->bqe', w[:, None, :].astype(h.dtype), h,
                     preferred_element_type=jnp.float32)
    out_ref[...] = out[:, 0, :].astype(out_ref.dtype)


# ----------------------------------------------------------------------------
# Wrapper
# ----------------------------------------------------------------------------
def activation_unit_forward(history, target, params, use_softmax=False,
                            compute_dtype=jnp.float32):
    """JAX/Pallas forward matching ActivationUnit.forward (incl. the dim=0 concat)."""
    B, S, E = history.shape
    if S % 4 != 0:
        # TODO(synk): general S (rows of the dim=0-concat view straddle batches).
        raise NotImplementedError("seq_len must be a multiple of 4")
    w1, b1, alpha, w2, b2 = params
    H = w1.shape[1]
    rpb = S // 4                      # MLP rows per (block, batch)
    R = B * rpb                       # MLP rows per concat block
    n_rows = B * S                    # Dice batch size (all 4 blocks)

    cdt = jnp.dtype(compute_dtype)
    itm = cdt.itemsize
    hist_c = history.astype(cdt)
    targ_c = target.astype(cdt)
    w1_c = w1.astype(cdt)
    # Algebraic decomposition: t4 @ w1 == t @ (sum of the four ExH slabs of w1).
    w1s_c = (w1[0:E] + w1[E:2 * E] + w1[2 * E:3 * E] + w1[3 * E:4 * E]).astype(cdt)
    w2row = jnp.reshape(w2, (1, H)).astype(jnp.float32)
    b1f = b1.astype(jnp.float32)

    tile_budget, vmem_limit = _vmem_plan()
    # Honest per-batch VMEM estimates (double-buffered streams + in-kernel temps).
    row_bytes = (2 * (rpb * 4 * E + E) * itm               # hist4 + target tiles (x2 bufs)
                 + (rpb * E + 2 * rpb * 4 * E) * itm       # t_rows, t4, t4*hg temporaries
                 + 7 * rpb * H * 4                         # h_t/h_g/h_p/diff + Dice temps
                 + 2 * rpb * 4 * 4)                        # logits tile (x2 bufs)
    apply_bytes = 2 * S * E * itm + 3 * S * 4 + 2 * E * 4
    resident = 2 * (5 * E * H * itm + 6 * H * 4)           # w1, w1_sum, b1/mean/rstd/w2 rows
    budget = max(tile_budget - resident, 256 * 1024)
    unit = 16 if itm == 2 else 8                           # bf16 packs 16 sublanes

    B_pad, (TB, TB3) = _plan_batch_tiling(B, [row_bytes, apply_bytes], budget, unit)
    if B_pad > B:
        hist_c = jnp.pad(hist_c, ((0, B_pad - B), (0, 0), (0, 0)))
        targ_c = jnp.pad(targ_c, ((0, B_pad - B), (0, 0)))
    hist4 = hist_c.reshape(B_pad * rpb, 4 * E)             # free reshape, no HBM concat
    R_pad = B_pad * rpb
    TR = TB * rpb
    grid_rows = (B_pad // TB,)
    G = grid_rows[0]

    cparams = pltpu.CompilerParams(dimension_semantics=("parallel",),
                                   vmem_limit_bytes=int(vmem_limit))

    row_in_specs = [
        pl.BlockSpec((TR, 4 * E), lambda i: (i, 0)),        # hist4 tile (streamed)
        pl.BlockSpec((TB, E), lambda i: (i, 0)),            # target tile (no repeat in HBM)
        pl.BlockSpec((4 * E, H), lambda i: (0, 0)),         # w1 (resident)
        pl.BlockSpec((E, H), lambda i: (0, 0)),             # w1_sum (resident)
    ]

    # Pass 1: per-tile partial Dice statistics; reduced in XLA so the grid axis is
    # fully "parallel" (megacore-shards on v7x, harmless elsewhere).
    psum, pssq = pl.pallas_call(
        functools.partial(_stats_kernel, rpb=rpb),
        out_shape=(jax.ShapeDtypeStruct((G, 1, H), jnp.float32),
                   jax.ShapeDtypeStruct((G, 1, H), jnp.float32)),
        grid=grid_rows,
        in_specs=row_in_specs,
        out_specs=(pl.BlockSpec((1, 1, H), lambda i: (i, 0, 0)),
                   pl.BlockSpec((1, 1, H), lambda i: (i, 0, 0))),
        compiler_params=cparams,
    )(hist4, targ_c, w1_c, w1s_c)

    sum0 = jnp.sum(psum, axis=0, dtype=jnp.float32)         # (1, H) sums of h0 (no bias)
    ssq0 = jnp.sum(pssq, axis=0, dtype=jnp.float32)
    mean0 = sum0 / n_rows                                   # padded rows contribute 0
    denom = max(n_rows - 1, 1)
    var = jnp.maximum(ssq0 - n_rows * mean0 * mean0, 0.0) / denom   # unbiased; var(h)=var(h0)
    rstd = jax.lax.rsqrt(var + _DICE_EPS)

    # Pass 2: attention logits, laid out (row-in-block, block) = (R_pad, 4).
    logits_r4 = pl.pallas_call(
        functools.partial(_logits_kernel, rpb=rpb),
        out_shape=jax.ShapeDtypeStruct((R_pad, 4), jnp.float32),
        grid=grid_rows,
        in_specs=row_in_specs + [
            pl.BlockSpec((1, H), lambda i: (0, 0)),              # b1
            pl.BlockSpec((1, H), lambda i: (0, 0)),              # mean0
            pl.BlockSpec((1, H), lambda i: (0, 0)),              # rstd
            pl.BlockSpec((1, H), lambda i: (0, 0)),              # w2 row
            pl.BlockSpec(memory_space=pltpu.MemorySpace.SMEM),   # alpha scalar
            pl.BlockSpec(memory_space=pltpu.MemorySpace.SMEM),   # b2 scalar
        ],
        out_specs=pl.BlockSpec((TR, 4), lambda i: (i, 0)),
        compiler_params=cparams,
    )(hist4, targ_c, w1_c, w1s_c, b1f, mean0, rstd, w2row,
      alpha.astype(jnp.float32), jnp.reshape(b2, (1, 1)).astype(jnp.float32))

    # Faithful to torch: att_weight.view(-1, S) on the block-major flat logits.
    att_weight = jnp.transpose(logits_r4[:R]).reshape(B, S)

    # Pass 3: optional softmax over S + MXU weighted sum over the sequence.
    if B_pad > B:
        att_weight = jnp.pad(att_weight, ((0, B_pad - B), (0, 0)))
    out = pl.pallas_call(
        functools.partial(_apply_kernel, use_softmax=use_softmax),
        out_shape=jax.ShapeDtypeStruct((B_pad, E), jnp.float32),
        grid=(B_pad // TB3,),
        in_specs=[pl.BlockSpec((TB3, S), lambda i: (i, 0)),
                  pl.BlockSpec((TB3, S, E), lambda i: (i, 0, 0))],
        out_specs=pl.BlockSpec((TB3, E), lambda i: (i, 0)),
        compiler_params=cparams,
    )(att_weight, hist_c)
    return out[:B]


# ----------------------------------------------------------------------------
# Pure-JAX reference (mirrors the PyTorch forward with the same assumed MLP)
# ----------------------------------------------------------------------------
def _reference(history, target, params, use_softmax=False):
    B, S, E = history.shape
    w1, b1, alpha, w2, b2 = params
    target_exp = jnp.broadcast_to(target[:, None, :], (B, S, E))
    att_cat = jnp.concatenate(
        [target_exp, history, target_exp - history, target_exp * history], axis=0)
    x = att_cat.reshape(-1, 4 * E)
    h = x @ w1 + b1
    n = h.shape[0]
    mean = jnp.mean(h, axis=0, keepdims=True)
    var = jnp.sum((h - mean) ** 2, axis=0, keepdims=True) / (n - 1)
    p = jax.nn.sigmoid((h - mean) / jnp.sqrt(var + _DICE_EPS))
    h = p * h + alpha * (1.0 - p) * h
    w = (h @ w2 + b2).reshape(B, S)
    if use_softmax:
        w = jax.nn.softmax(w, axis=-1)
    return jnp.sum(w[..., None] * history, axis=1)


def init_params(emb_dim, hidden, key):
    k1, k2, k3, k4 = jax.random.split(key, 4)
    w1 = jax.random.normal(k1, (4 * emb_dim, hidden), jnp.float32) * 0.1
    b1 = jax.random.normal(k2, (1, hidden), jnp.float32) * 0.01
    alpha = jnp.full((1, 1), 0.25, jnp.float32)
    w2 = jax.random.normal(k3, (hidden, 1), jnp.float32) * 0.1
    b2 = jax.random.normal(k4, (1, 1), jnp.float32) * 0.01
    return (w1, b1, alpha, w2, b2)


if __name__ == "__main__":
    B, S, E, H = 2, 8, 16, 36   # batch, seq_len, emb_dim, dims=[36]

    key = jax.random.PRNGKey(0)
    k_hist, k_tgt, k_par = jax.random.split(key, 3)
    history = jax.random.normal(k_hist, (B, S, E), jnp.float32)
    target = jax.random.normal(k_tgt, (B, E), jnp.float32)
    params = init_params(E, H, k_par)

    fwd = jax.jit(activation_unit_forward,
                  static_argnames=("use_softmax", "compute_dtype"))

    # f32 streaming: tight check against the pure-JAX reference.
    for use_softmax in (False, True):
        out = jax.block_until_ready(
            fwd(history, target, params, use_softmax=use_softmax,
                compute_dtype=jnp.float32))
        ref = _reference(history, target, params, use_softmax=use_softmax)
        assert out.shape == (B, E)
        assert jnp.allclose(out, ref, rtol=2e-3, atol=5e-4), \
            f"f32 mismatch (softmax={use_softmax})"

    # bf16 streaming (halves HBM bytes, f32 accumulation): looser check.
    for use_softmax in (False, True):
        out = jax.block_until_ready(
            fwd(history, target, params, use_softmax=use_softmax,
                compute_dtype=jnp.bfloat16))
        ref = _reference(history, target, params, use_softmax=use_softmax)
        assert out.shape == (B, E)
        assert jnp.allclose(out, ref, rtol=8e-2, atol=8e-2), \
            f"bf16 mismatch (softmax={use_softmax})"

    print("KERNEL_OK")
</pallas_src>

<mosaic_0001>
module attributes {stable_mosaic.version = 11 : i64} {
  func.func @_stats_kernel(%arg0: i32, %arg1: memref<4x64xf32, #tpu.memory_space<vmem>>, %arg2: memref<2x16xf32, #tpu.memory_space<vmem>>, %arg3: memref<64x36xf32, #tpu.memory_space<vmem>>, %arg4: memref<16x36xf32, #tpu.memory_space<vmem>>, %arg5: memref<1x1x36xf32, #tpu.memory_space<vmem>>, %arg6: memref<1x1x36xf32, #tpu.memory_space<vmem>>) attributes {dimension_semantics = [#tpu.dimension_semantics<parallel>], iteration_bounds = array<i64: 1>, scalar_prefetch = 0 : i64, scratch_operands = 0 : i64, tpu.core_type = #tpu.core_type<tc>, window_params = [{transform_indices = @transform_0, window_bounds = array<i64: 4, 64>}, {transform_indices = @transform_1, window_bounds = array<i64: 2, 16>}, {pipeline_mode = #tpu.pipeline_mode<synchronous>, transform_indices = @transform_2, window_bounds = array<i64: 64, 36>}, {pipeline_mode = #tpu.pipeline_mode<synchronous>, transform_indices = @transform_3, window_bounds = array<i64: 16, 36>}, {transform_indices = @transform_4, window_bounds = array<i64: 1, 1, 36>}, {transform_indices = @transform_5, window_bounds = array<i64: 1, 1, 36>}]} {
    %c0 = arith.constant 0 : index
    %c0_0 = arith.constant 0 : index
    %0 = vector.load %arg2[%c0, %c0_0] : memref<2x16xf32, #tpu.memory_space<vmem>>, vector<2x16xf32>
    %1 = vector.shape_cast %0 : vector<2x16xf32> to vector<2x1x16xf32>
    %2 = vector.shape_cast %1 : vector<2x1x16xf32> to vector<2x1x16xf32>
    %3 = vector.broadcast %2 : vector<2x1x16xf32> to vector<2x2x16xf32>
    %4 = vector.shape_cast %3 : vector<2x2x16xf32> to vector<4x16xf32>
    %c0_1 = arith.constant 0 : index
    %c0_2 = arith.constant 0 : index
    %5 = vector.load %arg1[%c0_1, %c0_2] : memref<4x64xf32, #tpu.memory_space<vmem>>, vector<4x64xf32>
    %6 = tpu.concatenate %4, %4, %4, %4 in 1 : vector<4x16xf32>, vector<4x16xf32>, vector<4x16xf32>, vector<4x16xf32> -> vector<4x64xf32>
    %c0_3 = arith.constant 0 : index
    %c0_4 = arith.constant 0 : index
    %7 = vector.load %arg4[%c0_3, %c0_4] : memref<16x36xf32, #tpu.memory_space<vmem>>, vector<16x36xf32>
    %cst = arith.constant dense<0.000000e+00> : vector<4x36xf32>
    %8 = tpu.matmul %4, %7, %cst {dimension_numbers = #tpu.dot_dimension_numbers<[1], [0], [0], [1], [0, 0, 1, 1], [], []>} : vector<4x16xf32>, vector<16x36xf32>, vector<4x36xf32> -> vector<4x36xf32>
    %c0_5 = arith.constant 0 : index
    %c0_6 = arith.constant 0 : index
    %9 = vector.load %arg3[%c0_5, %c0_6] : memref<64x36xf32, #tpu.memory_space<vmem>>, vector<64x36xf32>
    %cst_7 = arith.constant dense<0.000000e+00> : vector<4x36xf32>
    %10 = tpu.matmul %5, %9, %cst_7 {dimension_numbers = #tpu.dot_dimension_numbers<[1], [0], [0], [1], [0, 0, 1, 1], [], []>} : vector<4x64xf32>, vector<64x36xf32>, vector<4x36xf32> -> vector<4x36xf32>
    %11 = arith.mulf %6, %5 : vector<4x64xf32>
    %c0_8 = arith.constant 0 : index
    %c0_9 = arith.constant 0 : index
    %12 = vector.load %arg3[%c0_8, %c0_9] : memref<64x36xf32, #tpu.memory_space<vmem>>, vector<64x36xf32>
    %cst_10 = arith.constant dense<0.000000e+00> : vector<4x36xf32>
    %13 = tpu.matmul %11, %12, %cst_10 {dimension_numbers = #tpu.dot_dimension_numbers<[1], [0], [0], [1], [0, 0, 1, 1], [], []>} : vector<4x64xf32>, vector<64x36xf32>, vector<4x36xf32> -> vector<4x36xf32>
    %cst_11 = arith.constant 2.000000e+00 : f32
    %14 = vector.broadcast %cst_11 : f32 to vector<4x36xf32>
    %15 = arith.mulf %14, %8 : vector<4x36xf32>
    %16 = arith.addf %15, %13 : vector<4x36xf32>
    %cst_12 = arith.constant dense<0.000000e+00> : vector<36xf32>
    %17 = vector.multi_reduction <add>, %16, %cst_12 [0] : vector<4x36xf32> to vector<36xf32>
    %18 = vector.shape_cast %17 : vector<36xf32> to vector<1x36xf32>
    %cst_13 = arith.constant 2.000000e+00 : f32
    %19 = vector.broadcast %cst_13 : f32 to vector<4x36xf32>
    %20 = arith.mulf %19, %8 : vector<4x36xf32>
    %21 = arith.mulf %20, %8 : vector<4x36xf32>
    %cst_14 = arith.constant 2.000000e+00 : f32
    %22 = vector.broadcast %cst_14 : f32 to vector<4x36xf32>
    %23 = arith.mulf %22, %10 : vector<4x36xf32>
    %24 = arith.mulf %23, %10 : vector<4x36xf32>
    %25 = arith.addf %21, %24 : vector<4x36xf32>
    %cst_15 = arith.constant 2.000000e+00 : f32
    %26 = vector.broadcast %cst_15 : f32 to vector<4x36xf32>
    %27 = arith.mulf %26, %8 : vector<4x36xf32>
    %28 = arith.mulf %27, %10 : vector<4x36xf32>
    %29 = arith.subf %25, %28 : vector<4x36xf32>
    %30 = arith.mulf %13, %13 : vector<4x36xf32>
    %31 = arith.addf %29, %30 : vector<4x36xf32>
    %cst_16 = arith.constant dense<0.000000e+00> : vector<36xf32>
    %32 = vector.multi_reduction <add>, %31, %cst_16 [0] : vector<4x36xf32> to vector<36xf32>
    %33 = vector.shape_cast %32 : vector<36xf32> to vector<1x36xf32>
    %34 = vector.shape_cast %18 : vector<1x36xf32> to vector<1x1x36xf32>
    %c0_17 = arith.constant 0 : index
    %c0_18 = arith.constant 0 : index
    %c0_19 = arith.constant 0 : index
    %35 = vector.load %arg5[%c0_17, %c0_18, %c0_19] : memref<1x1x36xf32, #tpu.memory_space<vmem>>, vector<1x1x36xf32>
    tpu.vector_store %arg5[%c0_17, %c0_18, %c0_19], %34 {strides = array<i32>} : memref<1x1x36xf32, #tpu.memory_space<vmem>>, vector<1x1x36xf32>,
    %36 = vector.shape_cast %33 : vector<1x36xf32> to vector<1x1x36xf32>
    %c0_20 = arith.constant 0 : index
    %c0_21 = arith.constant 0 : index
    %c0_22 = arith.constant 0 : index
    %37 = vector.load %arg6[%c0_20, %c0_21, %c0_22] : memref<1x1x36xf32, #tpu.memory_space<vmem>>, vector<1x1x36xf32>
    tpu.vector_store %arg6[%c0_20, %c0_21, %c0_22], %36 {strides = array<i32>} : memref<1x1x36xf32, #tpu.memory_space<vmem>>, vector<1x1x36xf32>,
    return
  }
  func.func @transform_0(%arg0: i32) -> (i32, i32) {
    %c0_i32 = arith.constant 0 : i32
    %c0_i32_0 = arith.constant 0 : i32
    return %arg0, %c0_i32 : i32, i32
  }
  func.func @transform_1(%arg0: i32) -> (i32, i32) {
    %c0_i32 = arith.constant 0 : i32
    %c0_i32_0 = arith.constant 0 : i32
    return %arg0, %c0_i32 : i32, i32
  }
  func.func @transform_2(%arg0: i32) -> (i32, i32) {
    %c0_i32 = arith.constant 0 : i32
    %c0_i32_0 = arith.constant 0 : i32
    %c0_i32_1 = arith.constant 0 : i32
    return %c0_i32, %c0_i32_0 : i32, i32
  }
  func.func @transform_3(%arg0: i32) -> (i32, i32) {
    %c0_i32 = arith.constant 0 : i32
    %c0_i32_0 = arith.constant 0 : i32
    %c0_i32_1 = arith.constant 0 : i32
    return %c0_i32, %c0_i32_0 : i32, i32
  }
  func.func @transform_4(%arg0: i32) -> (i32, i32, i32) {
    %c0_i32 = arith.constant 0 : i32
    %c0_i32_0 = arith.constant 0 : i32
    %c0_i32_1 = arith.constant 0 : i32
    return %arg0, %c0_i32, %c0_i32_0 : i32, i32, i32
  }
  func.func @transform_5(%arg0: i32) -> (i32, i32, i32) {
    %c0_i32 = arith.constant 0 : i32
    %c0_i32_0 = arith.constant 0 : i32
    %c0_i32_1 = arith.constant 0 : i32
    return %arg0, %c0_i32, %c0_i32_0 : i32, i32, i32
  }
}

module attributes {stable_mosaic.version = 11 : i64} {
  func.func @_logits_kernel(%arg0: i32, %arg1: memref<4x64xf32, #tpu.memory_space<vmem>>, %arg2: memref<2x16xf32, #tpu.memory_space<vmem>>, %arg3: memref<64x36xf32, #tpu.memory_space<vmem>>, %arg4: memref<16x36xf32, #tpu.memory_space<vmem>>, %arg5: memref<1x36xf32, #tpu.memory_space<vmem>>, %arg6: memref<1x36xf32, #tpu.memory_space<vmem>>, %arg7: memref<1x36xf32, #tpu.memory_space<vmem>>, %arg8: memref<1x36xf32, #tpu.memory_space<vmem>>, %arg9: memref<1x1xf32, #tpu.memory_space<smem>>, %arg10: memref<1x1xf32, #tpu.memory_space<smem>>, %arg11: memref<4x4xf32, #tpu.memory_space<vmem>>) attributes {dimension_semantics = [#tpu.dimension_semantics<parallel>], iteration_bounds = array<i64: 1>, scalar_prefetch = 0 : i64, scratch_operands = 0 : i64, tpu.core_type = #tpu.core_type<tc>, window_params = [{transform_indices = @transform_0, window_bounds = array<i64: 4, 64>}, {transform_indices = @transform_1, window_bounds = array<i64: 2, 16>}, {pipeline_mode = #tpu.pipeline_mode<synchronous>, transform_indices = @transform_2, window_bounds = array<i64: 64, 36>}, {pipeline_mode = #tpu.pipeline_mode<synchronous>, transform_indices = @transform_3, window_bounds = array<i64: 16, 36>}, {pipeline_mode = #tpu.pipeline_mode<synchronous>, transform_indices = @transform_4, window_bounds = array<i64: 1, 36>}, {pipeline_mode = #tpu.pipeline_mode<synchronous>, transform_indices = @transform_5, window_bounds = array<i64: 1, 36>}, {pipeline_mode = #tpu.pipeline_mode<synchronous>, transform_indices = @transform_6, window_bounds = array<i64: 1, 36>}, {pipeline_mode = #tpu.pipeline_mode<synchronous>, transform_indices = @transform_7, window_bounds = array<i64: 1, 36>}, {transform_indices = @transform_8, window_bounds = array<i64: 1, 1>}, {transform_indices = @transform_9, window_bounds = array<i64: 1, 1>}, {transform_indices = @transform_10, window_bounds = array<i64: 4, 4>}]} {
    %c0 = arith.constant 0 : index
    %c0_0 = arith.constant 0 : index
    %0 = vector.load %arg2[%c0, %c0_0] : memref<2x16xf32, #tpu.memory_space<vmem>>, vector<2x16xf32>
    %1 = vector.shape_cast %0 : vector<2x16xf32> to vector<2x1x16xf32>
    %2 = vector.shape_cast %1 : vector<2x1x16xf32> to vector<2x1x16xf32>
    %3 = vector.broadcast %2 : vector<2x1x16xf32> to vector<2x2x16xf32>
    %4 = vector.shape_cast %3 : vector<2x2x16xf32> to vector<4x16xf32>
    %c0_1 = arith.constant 0 : index
    %c0_2 = arith.constant 0 : index
    %5 = vector.load %arg1[%c0_1, %c0_2] : memref<4x64xf32, #tpu.memory_space<vmem>>, vector<4x64xf32>
    %6 = tpu.concatenate %4, %4, %4, %4 in 1 : vector<4x16xf32>, vector<4x16xf32>, vector<4x16xf32>, vector<4x16xf32> -> vector<4x64xf32>
    %c0_3 = arith.constant 0 : index
    %c0_4 = arith.constant 0 : index
    %7 = vector.load %arg4[%c0_3, %c0_4] : memref<16x36xf32, #tpu.memory_space<vmem>>, vector<16x36xf32>
    %cst = arith.constant dense<0.000000e+00> : vector<4x36xf32>
    %8 = tpu.matmul %4, %7, %cst {dimension_numbers = #tpu.dot_dimension_numbers<[1], [0], [0], [1], [0, 0, 1, 1], [], []>} : vector<4x16xf32>, vector<16x36xf32>, vector<4x36xf32> -> vector<4x36xf32>
    %c0_5 = arith.constant 0 : index
    %c0_6 = arith.constant 0 : index
    %9 = vector.load %arg3[%c0_5, %c0_6] : memref<64x36xf32, #tpu.memory_space<vmem>>, vector<64x36xf32>
    %cst_7 = arith.constant dense<0.000000e+00> : vector<4x36xf32>
    %10 = tpu.matmul %5, %9, %cst_7 {dimension_numbers = #tpu.dot_dimension_numbers<[1], [0], [0], [1], [0, 0, 1, 1], [], []>} : vector<4x64xf32>, vector<64x36xf32>, vector<4x36xf32> -> vector<4x36xf32>
    %11 = arith.mulf %6, %5 : vector<4x64xf32>
    %c0_8 = arith.constant 0 : index
    %c0_9 = arith.constant 0 : index
    %12 = vector.load %arg3[%c0_8, %c0_9] : memref<64x36xf32, #tpu.memory_space<vmem>>, vector<64x36xf32>
    %cst_10 = arith.constant dense<0.000000e+00> : vector<4x36xf32>
    %13 = tpu.matmul %11, %12, %cst_10 {dimension_numbers = #tpu.dot_dimension_numbers<[1], [0], [0], [1], [0, 0, 1, 1], [], []>} : vector<4x64xf32>, vector<64x36xf32>, vector<4x36xf32> -> vector<4x36xf32>
    %c0_11 = arith.constant 0 : index
    %c0_12 = arith.constant 0 : index
    %14 = vector.load %arg5[%c0_11, %c0_12] : memref<1x36xf32, #tpu.memory_space<vmem>>, vector<1x36xf32>
    %c0_13 = arith.constant 0 : index
    %c0_14 = arith.constant 0 : index
    %15 = vector.load %arg6[%c0_13, %c0_14] : memref<1x36xf32, #tpu.memory_space<vmem>>, vector<1x36xf32>
    %c0_15 = arith.constant 0 : index
    %c0_16 = arith.constant 0 : index
    %16 = vector.load %arg7[%c0_15, %c0_16] : memref<1x36xf32, #tpu.memory_space<vmem>>, vector<1x36xf32>
    %c0_17 = arith.constant 0 : index
    %c0_18 = arith.constant 0 : index
    %17 = vector.load %arg8[%c0_17, %c0_18] : memref<1x36xf32, #tpu.memory_space<vmem>>, vector<1x36xf32>
    %c0_19 = arith.constant 0 : index
    %c0_20 = arith.constant 0 : index
    %18 = memref.load %arg9[%c0_19, %c0_20] : memref<1x1xf32, #tpu.memory_space<smem>>
    %c0_21 = arith.constant 0 : index
    %c0_22 = arith.constant 0 : index
    %19 = memref.load %arg10[%c0_21, %c0_22] : memref<1x1xf32, #tpu.memory_space<smem>>
    %20 = arith.subf %8, %10 : vector<4x36xf32>
    %21 = vector.broadcast %15 : vector<1x36xf32> to vector<4x36xf32>
    %22 = arith.subf %8, %21 : vector<4x36xf32>
    %23 = vector.broadcast %16 : vector<1x36xf32> to vector<4x36xf32>
    %24 = arith.mulf %22, %23 : vector<4x36xf32>
    %25 = arith.negf %24 : vector<4x36xf32>
    %26 = math.exp %25 : vector<4x36xf32>
    %cst_23 = arith.constant 1.000000e+00 : f32
    %27 = vector.broadcast %cst_23 : f32 to vector<4x36xf32>
    %28 = arith.addf %27, %26 : vector<4x36xf32>
    %29 = arith.divf %27, %28 : vector<4x36xf32>
    %cst_24 = arith.constant 1.000000e+00 : f32
    %30 = vector.broadcast %cst_24 : f32 to vector<4x36xf32>
    %31 = arith.subf %30, %29 : vector<4x36xf32>
    %32 = vector.broadcast %18 : f32 to vector<4x36xf32>
    %33 = arith.mulf %32, %31 : vector<4x36xf32>
    %34 = arith.addf %29, %33 : vector<4x36xf32>
    %35 = vector.broadcast %14 : vector<1x36xf32> to vector<4x36xf32>
    %36 = arith.addf %8, %35 : vector<4x36xf32>
    %37 = arith.mulf %34, %36 : vector<4x36xf32>
    %38 = vector.broadcast %17 : vector<1x36xf32> to vector<4x36xf32>
    %39 = arith.mulf %37, %38 : vector<4x36xf32>
    %cst_25 = arith.constant dense<0.000000e+00> : vector<4xf32>
    %40 = vector.multi_reduction <add>, %39, %cst_25 [1] : vector<4x36xf32> to vector<4xf32>
    %41 = vector.shape_cast %40 : vector<4xf32> to vector<4x1xf32>
    %42 = vector.broadcast %19 : f32 to vector<4x1xf32>
    %43 = arith.addf %41, %42 : vector<4x1xf32>
    %44 = vector.broadcast %15 : vector<1x36xf32> to vector<4x36xf32>
    %45 = arith.subf %10, %44 : vector<4x36xf32>
    %46 = vector.broadcast %16 : vector<1x36xf32> to vector<4x36xf32>
    %47 = arith.mulf %45, %46 : vector<4x36xf32>
    %48 = arith.negf %47 : vector<4x36xf32>
    %49 = math.exp %48 : vector<4x36xf32>
    %cst_26 = arith.constant 1.000000e+00 : f32
    %50 = vector.broadcast %cst_26 : f32 to vector<4x36xf32>
    %51 = arith.addf %50, %49 : vector<4x36xf32>
    %52 = arith.divf %50, %51 : vector<4x36xf32>
    %cst_27 = arith.constant 1.000000e+00 : f32
    %53 = vector.broadcast %cst_27 : f32 to vector<4x36xf32>
    %54 = arith.subf %53, %52 : vector<4x36xf32>
    %55 = vector.broadcast %18 : f32 to vector<4x36xf32>
    %56 = arith.mulf %55, %54 : vector<4x36xf32>
    %57 = arith.addf %52, %56 : vector<4x36xf32>
    %58 = vector.broadcast %14 : vector<1x36xf32> to vector<4x36xf32>
    %59 = arith.addf %10, %58 : vector<4x36xf32>
    %60 = arith.mulf %57, %59 : vector<4x36xf32>
    %61 = vector.broadcast %17 : vector<1x36xf32> to vector<4x36xf32>
    %62 = arith.mulf %60, %61 : vector<4x36xf32>
    %cst_28 = arith.constant dense<0.000000e+00> : vector<4xf32>
    %63 = vector.multi_reduction <add>, %62, %cst_28 [1] : vector<4x36xf32> to vector<4xf32>
    %64 = vector.shape_cast %63 : vector<4xf32> to vector<4x1xf32>
    %65 = vector.broadcast %19 : f32 to vector<4x1xf32>
    %66 = arith.addf %64, %65 : vector<4x1xf32>
    %67 = vector.broadcast %15 : vector<1x36xf32> to vector<4x36xf32>
    %68 = arith.subf %20, %67 : vector<4x36xf32>
    %69 = vector.broadcast %16 : vector<1x36xf32> to vector<4x36xf32>
    %70 = arith.mulf %68, %69 : vector<4x36xf32>
    %71 = arith.negf %70 : vector<4x36xf32>
    %72 = math.exp %71 : vector<4x36xf32>
    %cst_29 = arith.constant 1.000000e+00 : f32
    %73 = vector.broadcast %cst_29 : f32 to vector<4x36xf32>
    %74 = arith.addf %73, %72 : vector<4x36xf32>
    %75 = arith.divf %73, %74 : vector<4x36xf32>
    %cst_30 = arith.constant 1.000000e+00 : f32
    %76 = vector.broadcast %cst_30 : f32 to vector<4x36xf32>
    %77 = arith.subf %76, %75 : vector<4x36xf32>
    %78 = vector.broadcast %18 : f32 to vector<4x36xf32>
    %79 = arith.mulf %78, %77 : vector<4x36xf32>
    %80 = arith.addf %75, %79 : vector<4x36xf32>
    %81 = vector.broadcast %14 : vector<1x36xf32> to vector<4x36xf32>
    %82 = arith.addf %20, %81 : vector<4x36xf32>
    %83 = arith.mulf %80, %82 : vector<4x36xf32>
    %84 = vector.broadcast %17 : vector<1x36xf32> to vector<4x36xf32>
    %85 = arith.mulf %83, %84 : vector<4x36xf32>
    %cst_31 = arith.constant dense<0.000000e+00> : vector<4xf32>
    %86 = vector.multi_reduction <add>, %85, %cst_31 [1] : vector<4x36xf32> to vector<4xf32>
    %87 = vector.shape_cast %86 : vector<4xf32> to vector<4x1xf32>
    %88 = vector.broadcast %19 : f32 to vector<4x1xf32>
    %89 = arith.addf %87, %88 : vector<4x1xf32>
    %90 = vector.broadcast %15 : vector<1x36xf32> to vector<4x36xf32>
    %91 = arith.subf %13, %90 : vector<4x36xf32>
    %92 = vector.broadcast %16 : vector<1x36xf32> to vector<4x36xf32>
    %93 = arith.mulf %91, %92 : vector<4x36xf32>
    %94 = arith.negf %93 : vector<4x36xf32>
    %95 = math.exp %94 : vector<4x36xf32>
    %cst_32 = arith.constant 1.000000e+00 : f32
    %96 = vector.broadcast %cst_32 : f32 to vector<4x36xf32>
    %97 = arith.addf %96, %95 : vector<4x36xf32>
    %98 = arith.divf %96, %97 : vector<4x36xf32>
    %cst_33 = arith.constant 1.000000e+00 : f32
    %99 = vector.broadcast %cst_33 : f32 to vector<4x36xf32>
    %100 = arith.subf %99, %98 : vector<4x36xf32>
    %101 = vector.broadcast %18 : f32 to vector<4x36xf32>
    %102 = arith.mulf %101, %100 : vector<4x36xf32>
    %103 = arith.addf %98, %102 : vector<4x36xf32>
    %104 = vector.broadcast %14 : vector<1x36xf32> to vector<4x36xf32>
    %105 = arith.addf %13, %104 : vector<4x36xf32>
    %106 = arith.mulf %103, %105 : vector<4x36xf32>
    %107 = vector.broadcast %17 : vector<1x36xf32> to vector<4x36xf32>
    %108 = arith.mulf %106, %107 : vector<4x36xf32>
    %cst_34 = arith.constant dense<0.000000e+00> : vector<4xf32>
    %109 = vector.multi_reduction <add>, %108, %cst_34 [1] : vector<4x36xf32> to vector<4xf32>
    %110 = vector.shape_cast %109 : vector<4xf32> to vector<4x1xf32>
    %111 = vector.broadcast %19 : f32 to vector<4x1xf32>
    %112 = arith.addf %110, %111 : vector<4x1xf32>
    %113 = tpu.concatenate %43, %66, %89, %112 in 1 : vector<4x1xf32>, vector<4x1xf32>, vector<4x1xf32>, vector<4x1xf32> -> vector<4x4xf32>
    %c0_35 = arith.constant 0 : index
    %c0_36 = arith.constant 0 : index
    %114 = vector.load %arg11[%c0_35, %c0_36] : memref<4x4xf32, #tpu.memory_space<vmem>>, vector<4x4xf32>
    tpu.vector_store %arg11[%c0_35, %c0_36], %113 {strides = array<i32>} : memref<4x4xf32, #tpu.memory_space<vmem>>, vector<4x4xf32>,
    return
  }
  func.func @transform_0(%arg0: i32) -> (i32, i32) {
    %c0_i32 = arith.constant 0 : i32
    %c0_i32_0 = arith.constant 0 : i32
    return %arg0, %c0_i32 : i32, i32
  }
  func.func @transform_1(%arg0: i32) -> (i32, i32) {
    %c0_i32 = arith.constant 0 : i32
    %c0_i32_0 = arith.constant 0 : i32
    return %arg0, %c0_i32 : i32, i32
  }
  func.func @transform_2(%arg0: i32) -> (i32, i32) {
    %c0_i32 = arith.constant 0 : i32
    %c0_i32_0 = arith.constant 0 : i32
    %c0_i32_1 = arith.constant 0 : i32
    return %c0_i32, %c0_i32_0 : i32, i32
  }
  func.func @transform_3(%arg0: i32) -> (i32, i32) {
    %c0_i32 = arith.constant 0 : i32
    %c0_i32_0 = arith.constant 0 : i32
    %c0_i32_1 = arith.constant 0 : i32
    return %c0_i32, %c0_i32_0 : i32, i32
  }
  func.func @transform_4(%arg0: i32) -> (i32, i32) {
    %c0_i32 = arith.constant 0 : i32
    %c0_i32_0 = arith.constant 0 : i32
    %c0_i32_1 = arith.constant 0 : i32
    return %c0_i32, %c0_i32_0 : i32, i32
  }
  func.func @transform_5(%arg0: i32) -> (i32, i32) {
    %c0_i32 = arith.constant 0 : i32
    %c0_i32_0 = arith.constant 0 : i32
    %c0_i32_1 = arith.constant 0 : i32
    return %c0_i32, %c0_i32_0 : i32, i32
  }
  func.func @transform_6(%arg0: i32) -> (i32, i32) {
    %c0_i32 = arith.constant 0 : i32
    %c0_i32_0 = arith.constant 0 : i32
    %c0_i32_1 = arith.constant 0 : i32
    return %c0_i32, %c0_i32_0 : i32, i32
  }
  func.func @transform_7(%arg0: i32) -> (i32, i32) {
    %c0_i32 = arith.constant 0 : i32
    %c0_i32_0 = arith.constant 0 : i32
    %c0_i32_1 = arith.constant 0 : i32
    return %c0_i32, %c0_i32_0 : i32, i32
  }
  func.func @transform_8(%arg0: i32) -> (i32, i32) {
    %c0_i32 = arith.constant 0 : i32
    %c0_i32_0 = arith.constant 0 : i32
    %c0_i32_1 = arith.constant 0 : i32
    return %c0_i32, %c0_i32_0 : i32, i32
  }
  func.func @transform_9(%arg0: i32) -> (i32, i32) {
    %c0_i32 = arith.constant 0 : i32
    %c0_i32_0 = arith.constant 0 : i32
    %c0_i32_1 = arith.constant 0 : i32
    return %c0_i32, %c0_i32_0 : i32, i32
  }
  func.func @transform_10(%arg0: i32) -> (i32, i32) {
    %c0_i32 = arith.constant 0 : i32
    %c0_i32_0 = arith.constant 0 : i32
    return %arg0, %c0_i32 : i32, i32
  }
}

module attributes {stable_mosaic.version = 11 : i64} {
  func.func @_apply_kernel(%arg0: i32, %arg1: memref<2x8xf32, #tpu.memory_space<vmem>>, %arg2: memref<2x8x16xf32, #tpu.memory_space<vmem>>, %arg3: memref<2x16xf32, #tpu.memory_space<vmem>>) attributes {dimension_semantics = [#tpu.dimension_semantics<parallel>], iteration_bounds = array<i64: 1>, scalar_prefetch = 0 : i64, scratch_operands = 0 : i64, tpu.core_type = #tpu.core_type<tc>, window_params = [{transform_indices = @transform_0, window_bounds = array<i64: 2, 8>}, {transform_indices = @transform_1, window_bounds = array<i64: 2, 8, 16>}, {transform_indices = @transform_2, window_bounds = array<i64: 2, 16>}]} {
    %c0 = arith.constant 0 : index
    %c0_0 = arith.constant 0 : index
    %0 = vector.load %arg1[%c0, %c0_0] : memref<2x8xf32, #tpu.memory_space<vmem>>, vector<2x8xf32>
    %c0_1 = arith.constant 0 : index
    %c0_2 = arith.constant 0 : index
    %c0_3 = arith.constant 0 : index
    %1 = vector.load %arg2[%c0_1, %c0_2, %c0_3] : memref<2x8x16xf32, #tpu.memory_space<vmem>>, vector<2x8x16xf32>
    %2 = vector.shape_cast %0 : vector<2x8xf32> to vector<2x1x8xf32>
    "tpu.trace_start"() <{level = 10 : i32, message = "bqs,bse->bqe"}> : () -> ()
    %cst = arith.constant dense<0.000000e+00> : vector<2x1x16xf32>
    %3 = tpu.matmul %2, %1, %cst {dimension_numbers = #tpu.dot_dimension_numbers<[2], [1], [1], [2], [0, 0, 0, 1, 1, 2], [0], [0]>} : vector<2x1x8xf32>, vector<2x8x16xf32>, vector<2x1x16xf32> -> vector<2x1x16xf32>
    "tpu.trace_stop"() : () -> ()
    %4 = vector.shape_cast %3 : vector<2x1x16xf32> to vector<2x16xf32>
    %c0_4 = arith.constant 0 : index
    %c0_5 = arith.constant 0 : index
    %5 = vector.load %arg3[%c0_4, %c0_5] : memref<2x16xf32, #tpu.memory_space<vmem>>, vector<2x16xf32>
    tpu.vector_store %arg3[%c0_4, %c0_5], %4 {strides = array<i32>} : memref<2x16xf32, #tpu.memory_space<vmem>>, vector<2x16xf32>,
    return
  }
  func.func @transform_0(%arg0: i32) -> (i32, i32) {
    %c0_i32 = arith.constant 0 : i32
    %c0_i32_0 = arith.constant 0 : i32
    return %arg0, %c0_i32 : i32, i32
  }
  func.func @transform_1(%arg0: i32) -> (i32, i32, i32) {
    %c0_i32 = arith.constant 0 : i32
    %c0_i32_0 = arith.constant 0 : i32
    %c0_i32_1 = arith.constant 0 : i32
    return %arg0, %c0_i32, %c0_i32_0 : i32, i32, i32
  }
  func.func @transform_2(%arg0: i32) -> (i32, i32) {
    %c0_i32 = arith.constant 0 : i32
    %c0_i32_0 = arith.constant 0 : i32
    return %arg0, %c0_i32 : i32, i32
  }
}

</mosaic_0001>

<llo_original>
// kernel: activation_unit_forward.3
$region0: #{activation_unit_forward.3}
  #allocation0 [shape = 'u32[]', space=smem, size = 0x4, offset = 0x4, fixed_abs, tag = 'smem constant byte address 0x4 - core index']
  #allocation1 [shape = 'u32[144,128]{1,0:T(1,128)}', space=vmem, size = 0x12000, scoped, tag = 'internal scratch']
  %s0 = inlined_call_operand.vmem [shape: f32[4,64], index: 0, kind: input, shape index: {}]
  %s1 = inlined_call_operand.vmem [shape: f32[2,16], index: 1, kind: input, shape index: {}]
  %s2 = inlined_call_operand.vmem [shape: f32[64,36], index: 2, kind: input, shape index: {}]
  %s3 = inlined_call_operand.vmem [shape: f32[16,36], index: 3, kind: input, shape index: {}]
  %s4 = inlined_call_operand.vmem [shape: f32[1,1,36], index: 4, kind: output, shape index: {0}]
  %s5 = inlined_call_operand.vmem [shape: f32[1,1,36], index: 5, kind: output, shape index: {1}]
  %6 = xla_tuple %s4, %s5
  %s7 = sld [smem:[#allocation0]]
  $region34: #{activation_unit_forward.3} parent=0
    _
  %s9 = ssub.s32 1, %s7
  %s10 = scalar_select 0, %s9, %s7
  // Predicated region
  $region2: #{activation_unit_forward.3} parent=0 // pred_check
    _
  $region3: #{activation_unit_forward.3} parent=0 // pred_check_branch
    %12 = sbr.rel (0) target = $region5
  $region4: #{activation_unit_forward.3} parent=0 // pred_region
    _
  $region5: #{activation_unit_forward.3} parent=0 // pred_fallthru
    _
  // Predicated region
  $region6: #{activation_unit_forward.3} parent=0 // pred_check
    _
  $region7: #{activation_unit_forward.3} parent=0 // pred_check_branch
    %14 = sbr.rel (0) target = $region9
  $region8: #{activation_unit_forward.3} parent=0 // pred_region
    _
  $region9: #{activation_unit_forward.3} parent=0 // pred_fallthru
    _
  // Predicated region
  $region10: #{activation_unit_forward.3} parent=0 // pred_check
    _
  $region11: #{activation_unit_forward.3} parent=0 // pred_check_branch
    %16 = sbr.rel (0) target = $region13
  $region12: #{activation_unit_forward.3} parent=0 // pred_region
    _
  $region13: #{activation_unit_forward.3} parent=0 // pred_fallthru
    _
  // Predicated region
  $region14: #{activation_unit_forward.3} parent=0 // pred_check
    _
  $region15: #{activation_unit_forward.3} parent=0 // pred_check_branch
    %18 = sbr.rel (0) target = $region17
  $region16: #{activation_unit_forward.3} parent=0 // pred_region
    _
  $region17: #{activation_unit_forward.3} parent=0 // pred_fallthru
    _
  %v19 = vld [vmem:[%s1] sm:$0x3]
  %v22 = vunpack.c.l.s4 1966171168
  %v23 = vunpack.c.0.s8 %v22
  %v24 = vlaneseq
  %v25 = vshrl.u32 %v24, 7
  %v26 = vsub.s32 %v23, %v25
  %v27 = vrot.slane %v19, %v26
  %v28 = vcombine.high %v27, %v27
  %v30 = vunpack.c.l.s4 1966171168
  %v31 = vunpack.c.0.s8 %v30
  %v32 = vlaneseq
  %v33 = vshrl.u32 %v32, 7
  %v34 = vsub.s32 %v31, %v33
  %v35 = vrot.slane %v27, %v34
  %v37 = vunpack.c.l.s4 1966171168
  %v38 = vunpack.c.0.s8 %v37
  %v39 = vlaneseq
  %v40 = vshrl.u32 %v39, 7
  %v41 = vsub.s32 %v38, %v40
  %v42 = vrot.slane %v28, %v41
  %v43 = vlaneseq
  %v44 = vshrl.u32 %v43, 7
  %v45 = vsub.s32 0, %v44
  %v46 = vrot.slane %v35, %v45
  %v47 = vlaneseq
  %v48 = vshrl.u32 %v47, 7
  %v49 = vsub.s32 0, %v48
  %v50 = vrot.slane %v42, %v49
  %v51 = vld [vmem:[%s0] sm:$0xf]
  %v52 = vcombine.low %v46, %v50
  %v54 = vunpack.c.l.s4 1983009808
  %v55 = vunpack.c.0.s8 %v54
  %v56 = vlaneseq
  %v57 = vshrl.u32 %v56, 7
  %v58 = vsub.s32 %v55, %v57
  %v59 = vrot.slane %v52, %v58
  %61 = vrot.lane.b32.xlu0 %v59, 16
  %v62 = vpop.permute.xlu0 %61
  %64 = vrot.lane.b32.xlu0 %v59, 32
  %v65 = vpop.permute.xlu0 %64
  %67 = vrot.lane.b32.xlu0 %v59, 48
  %v68 = vpop.permute.xlu0 %67
  %vm70 = vcmask 130048
  %v71 = vsel %vm70, %v59, %v62
  %vm72 = vcmask 261120
  %v73 = vsel %vm72, %v71, %v65
  %vm74 = vcmask 392192
  %v75 = vsel %vm74, %v73, %v68
  %v76 = vld [vmem:[%s3] sm:$0xff]
  %v77 = vld [vmem:[%s3 + $0x8] sm:$0xff]
  %v78 = vsel %vm70, %v59, 0
  %80 = vmatprep.subr.mxu0 0.0
  %81 = vmatpush1.msra.mxu0 %v76
  %82 = vmatprep.subr.mxu0 0.0
  %83 = vmatpush1.msra.mxu0 %v77
  %84 = vmatprep.subr.mxu0 0.0
  %85 = vmatpush1.msra.mxu0 0.0
  %86 = vmatprep.subr.mxu0 0.0
  %87 = vmatpush1.msra.mxu0 0.0
  %88 = vmatprep.subr.mxu0 0.0
  %89 = vmatpush1.msra.mxu0 0.0
  %90 = vmatprep.subr.mxu0 0.0
  %91 = vmatpush1.msra.mxu0 0.0
  %92 = vmatprep.subr.mxu0 0.0
  %93 = vmatpush1.msra.mxu0 0.0
  %94 = vmatprep.subr.mxu0 0.0
  %95 = vmatpush1.msra.mxu0 0.0
  %96 = vmatprep.subr.mxu0 0.0
  %97 = vmatpush1.msra.mxu0 0.0
  %98 = vmatprep.subr.mxu0 0.0
  %99 = vmatpush1.msra.mxu0 0.0
  %100 = vmatprep.subr.mxu0 0.0
  %101 = vmatpush1.msra.mxu0 0.0
  %102 = vmatprep.subr.mxu0 0.0
  %103 = vmatpush1.msra.mxu0 0.0
  %104 = vmatprep.subr.mxu0 0.0
  %105 = vmatpush1.msra.mxu0 0.0
  %106 = vmatprep.subr.mxu0 0.0
  %107 = vmatpush1.msra.mxu0 0.0
  %108 = vmatprep.subr.mxu0 0.0
  %109 = vmatpush1.msra.mxu0 0.0
  %110 = vmatprep.subr.mxu0 0.0
  %111 = vmatpush1.msra.mxu0 0.0
  %112 = vmatprep.subr.mxu0 0.0
  %113 = vmatpush1.msra.mxu0 0.0
  %114 = vmatprep.subr.mxu0 0.0
  %115 = vmatpush1.msra.mxu0 0.0
  %116 = vmatprep.subr.mxu0 0.0
  %117 = vmatpush1.msra.mxu0 0.0
  %118 = vmatprep.subr.mxu0 0.0
  %119 = vmatpush1.msra.mxu0 0.0
  %120 = vmatprep.subr.mxu0 0.0
  %121 = vmatpush1.msra.mxu0 0.0
  %122 = vmatprep.subr.mxu0 0.0
  %123 = vmatpush1.msra.mxu0 0.0
  %124 = vmatprep.subr.mxu0 0.0
  %125 = vmatpush1.msra.mxu0 0.0
  %126 = vmatprep.subr.mxu0 0.0
  %127 = vmatpush1.msra.mxu0 0.0
  %128 = vmatprep.subr.mxu0 0.0
  %129 = vmatpush1.msra.mxu0 0.0
  %130 = vmatprep.subr.mxu0 0.0
  %131 = vmatpush1.msra.mxu0 0.0
  %132 = vmatprep.subr.mxu0 0.0
  %133 = vmatpush1.msra.mxu0 0.0
  %134 = vmatprep.subr.mxu0 0.0
  %135 = vmatpush1.msra.mxu0 0.0
  %136 = vmatprep.subr.mxu0 0.0
  %137 = vmatpush1.msra.mxu0 0.0
  %138 = vmatprep.subr.mxu0 0.0
  %139 = vmatpush1.msra.mxu0 0.0
  %140 = vmatprep.subr.mxu0 0.0
  %141 = vmatpush1.msra.mxu0 0.0
  %142 = vmatprep.subr.mxu0 0.0
  %143 = vmatpush1.msra.mxu0 0.0
  %144 = vmatprep.mubr.f32.mxu0 0.0
  %145 = vmatmul.mubr.f32.gmra.mrb[0].mxu0 %v78
  %v146 = vpop.f32.mrb[0].mxu0
  %v147 = vadd.f32 0.0, %v146
  %v148 = vpop.f32.mrb[0].mxu0
  %149 = vdwg.mxu0
  %v150 = vld [vmem:[%s2] sm:$0xff]
  %v151 = vld [vmem:[%s2 + $0x8] sm:$0xff]
  %v152 = vld [vmem:[%s2 + $0x10] sm:$0xff]
  %v153 = vld [vmem:[%s2 + $0x18] sm:$0xff]
  %v154 = vld [vmem:[%s2 + $0x20] sm:$0xff]
  %v155 = vld [vmem:[%s2 + $0x28] sm:$0xff]
  %v156 = vld [vmem:[%s2 + $0x30] sm:$0xff]
  %v157 = vld [vmem:[%s2 + $0x38] sm:$0xff]
  %vm158 = vcmask 523264
  %v160 = vsel %vm158, %v51, 0
  %162 = vmatprep.subr.mxu0 0.0
  %163 = vmatpush1.msra.mxu0 %v150
  %164 = vmatprep.subr.mxu0 0.0
  %165 = vmatpush1.msra.mxu0 %v151
  %166 = vmatprep.subr.mxu0 0.0
  %167 = vmatpush1.msra.mxu0 %v152
  %168 = vmatprep.subr.mxu0 0.0
  %169 = vmatpush1.msra.mxu0 %v153
  %170 = vmatprep.subr.mxu0 0.0
  %171 = vmatpush1.msra.mxu0 %v154
  %172 = vmatprep.subr.mxu0 0.0
  %173 = vmatpush1.msra.mxu0 %v155
  %174 = vmatprep.subr.mxu0 0.0
  %175 = vmatpush1.msra.mxu0 %v156
  %176 = vmatprep.subr.mxu0 0.0
  %177 = vmatpush1.msra.mxu0 %v157
  %178 = vmatprep.subr.mxu0 0.0
  %179 = vmatpush1.msra.mxu0 0.0
  %180 = vmatprep.subr.mxu0 0.0
  %181 = vmatpush1.msra.mxu0 0.0
  %182 = vmatprep.subr.mxu0 0.0
  %183 = vmatpush1.msra.mxu0 0.0
  %184 = vmatprep.subr.mxu0 0.0
  %185 = vmatpush1.msra.mxu0 0.0
  %186 = vmatprep.subr.mxu0 0.0
  %187 = vmatpush1.msra.mxu0 0.0
  %188 = vmatprep.subr.mxu0 0.0
  %189 = vmatpush1.msra.mxu0 0.0
  %190 = vmatprep.subr.mxu0 0.0
  %191 = vmatpush1.msra.mxu0 0.0
  %192 = vmatprep.subr.mxu0 0.0
  %193 = vmatpush1.msra.mxu0 0.0
  %194 = vmatprep.subr.mxu0 0.0
  %195 = vmatpush1.msra.mxu0 0.0
  %196 = vmatprep.subr.mxu0 0.0
  %197 = vmatpush1.msra.mxu0 0.0
  %198 = vmatprep.subr.mxu0 0.0
  %199 = vmatpush1.msra.mxu0 0.0
  %200 = vmatprep.subr.mxu0 0.0
  %201 = vmatpush1.msra.mxu0 0.0
  %202 = vmatprep.subr.mxu0 0.0
  %203 = vmatpush1.msra.mxu0 0.0
  %204 = vmatprep.subr.mxu0 0.0
  %205 = vmatpush1.msra.mxu0 0.0
  %206 = vmatprep.subr.mxu0 0.0
  %207 = vmatpush1.msra.mxu0 0.0
  %208 = vmatprep.subr.mxu0 0.0
  %209 = vmatpush1.msra.mxu0 0.0
  %210 = vmatprep.subr.mxu0 0.0
  %211 = vmatpush1.msra.mxu0 0.0
  %212 = vmatprep.subr.mxu0 0.0
  %213 = vmatpush1.msra.mxu0 0.0
  %214 = vmatprep.subr.mxu0 0.0
  %215 = vmatpush1.msra.mxu0 0.0
  %216 = vmatprep.subr.mxu0 0.0
  %217 = vmatpush1.msra.mxu0 0.0
  %218 = vmatprep.subr.mxu0 0.0
  %219 = vmatpush1.msra.mxu0 0.0
  %220 = vmatprep.subr.mxu0 0.0
  %221 = vmatpush1.msra.mxu0 0.0
  %222 = vmatprep.subr.mxu0 0.0
  %223 = vmatpush1.msra.mxu0 0.0
  %224 = vmatprep.subr.mxu0 0.0
  %225 = vmatpush1.msra.mxu0 0.0
  %226 = vmatprep.mubr.f32.mxu0 0.0
  %227 = vmatmul.mubr.f32.gmra.mrb[0].mxu0 %v160
  %v228 = vpop.f32.mrb[0].mxu0
  %v229 = vadd.f32 0.0, %v228
  %v230 = vpop.f32.mrb[0].mxu0
  %231 = vdwg.mxu0
  %v232 = vmul.f32 %v75, %v51
  %v234 = vsel %vm158, %v232, 0
  %236 = vmatprep.subr.mxu0 0.0
  %237 = vmatpush1.msra.mxu0 %v150
  %238 = vmatprep.subr.mxu0 0.0
  %239 = vmatpush1.msra.mxu0 %v151
  %240 = vmatprep.subr.mxu0 0.0
  %241 = vmatpush1.msra.mxu0 %v152
  %242 = vmatprep.subr.mxu0 0.0
  %243 = vmatpush1.msra.mxu0 %v153
  %244 = vmatprep.subr.mxu0 0.0
  %245 = vmatpush1.msra.mxu0 %v154
  %246 = vmatprep.subr.mxu0 0.0
  %247 = vmatpush1.msra.mxu0 %v155
  %248 = vmatprep.subr.mxu0 0.0
  %249 = vmatpush1.msra.mxu0 %v156
  %250 = vmatprep.subr.mxu0 0.0
  %251 = vmatpush1.msra.mxu0 %v157
  %252 = vmatprep.subr.mxu0 0.0
  %253 = vmatpush1.msra.mxu0 0.0
  %254 = vmatprep.subr.mxu0 0.0
  %255 = vmatpush1.msra.mxu0 0.0
  %256 = vmatprep.subr.mxu0 0.0
  %257 = vmatpush1.msra.mxu0 0.0
  %258 = vmatprep.subr.mxu0 0.0
  %259 = vmatpush1.msra.mxu0 0.0
  %260 = vmatprep.subr.mxu0 0.0
  %261 = vmatpush1.msra.mxu0 0.0
  %262 = vmatprep.subr.mxu0 0.0
  %263 = vmatpush1.msra.mxu0 0.0
  %264 = vmatprep.subr.mxu0 0.0
  %265 = vmatpush1.msra.mxu0 0.0
  %266 = vmatprep.subr.mxu0 0.0
  %267 = vmatpush1.msra.mxu0 0.0
  %268 = vmatprep.subr.mxu0 0.0
  %269 = vmatpush1.msra.mxu0 0.0
  %270 = vmatprep.subr.mxu0 0.0
  %271 = vmatpush1.msra.mxu0 0.0
  %272 = vmatprep.subr.mxu0 0.0
  %273 = vmatpush1.msra.mxu0 0.0
  %274 = vmatprep.subr.mxu0 0.0
  %275 = vmatpush1.msra.mxu0 0.0
  %276 = vmatprep.subr.mxu0 0.0
  %277 = vmatpush1.msra.mxu0 0.0
  %278 = vmatprep.subr.mxu0 0.0
  %279 = vmatpush1.msra.mxu0 0.0
  %280 = vmatprep.subr.mxu0 0.0
  %281 = vmatpush1.msra.mxu0 0.0
  %282 = vmatprep.subr.mxu0 0.0
  %283 = vmatpush1.msra.mxu0 0.0
  %284 = vmatprep.subr.mxu0 0.0
  %285 = vmatpush1.msra.mxu0 0.0
  %286 = vmatprep.subr.mxu0 0.0
  %287 = vmatpush1.msra.mxu0 0.0
  %288 = vmatprep.subr.mxu0 0.0
  %289 = vmatpush1.msra.mxu0 0.0
  %290 = vmatprep.subr.mxu0 0.0
  %291 = vmatpush1.msra.mxu0 0.0
  %292 = vmatprep.subr.mxu0 0.0
  %293 = vmatpush1.msra.mxu0 0.0
  %294 = vmatprep.subr.mxu0 0.0
  %295 = vmatpush1.msra.mxu0 0.0
  %296 = vmatprep.subr.mxu0 0.0
  %297 = vmatpush1.msra.mxu0 0.0
  %298 = vmatprep.subr.mxu0 0.0
  %299 = vmatpush1.msra.mxu0 0.0
  %300 = vmatprep.mubr.f32.mxu0 0.0
  %301 = vmatmul.mubr.f32.gmra.mrb[0].mxu0 %v234
  %v302 = vpop.f32.mrb[0].mxu0
  %v303 = vadd.f32 0.0, %v302
  %v304 = vpop.f32.mrb[0].mxu0
  %305 = vdwg.mxu0
  %v306 = vmul.f32 %v147, 2.0
  %v307 = vadd.f32 %v306, %v303
  %vm308 = vcmask 289792
  %v309 = vsel %vm308, %v307, 0.0
  %v310 = vrot.slane %v309, 4
  %v311 = vadd.f32 %v309, %v310
  %v312 = vrot.slane %v311, 2
  %v313 = vadd.f32 %v311, %v312
  %v314 = vrot.slane %v313, 1
  %v315 = vadd.f32 %v313, %v314
  %v316 = vmul.f32 %v306, %v147
  %v317 = vmul.f32 %v229, 2.0
  %v318 = vmul.f32 %v317, %v229
  %v319 = vadd.f32 %v316, %v318
  %v320 = vmul.f32 %v306, %v229
  %v321 = vsub.f32 %v319, %v320
  %v322 = vmul.f32 %v303, %v303
  %v323 = vadd.f32 %v321, %v322
  %v324 = vsel %vm308, %v323, 0.0
  %v325 = vrot.slane %v324, 4
  %v326 = vadd.f32 %v324, %v325
  %v327 = vrot.slane %v326, 2
  %v328 = vadd.f32 %v326, %v327
  %v329 = vrot.slane %v328, 1
  %v330 = vadd.f32 %v328, %v329
  %vm331 = vcmask 286720
  %332 = vst.msk [vmem:[%s4] sm:$0x1] %vm331, %v315
  %333 = vst.msk [vmem:[%s5] sm:$0x1] %vm331, %v330
  // Predicated region
  $region18: #{activation_unit_forward.3} parent=0 // pred_check
    _
  $region19: #{activation_unit_forward.3} parent=0 // pred_check_branch
    %335 = sbr.rel (0) target = $region21
  $region20: #{activation_unit_forward.3} parent=0 // pred_region
    _
  $region21: #{activation_unit_forward.3} parent=0 // pred_fallthru
    _
  // Predicated region
  $region22: #{activation_unit_forward.3} parent=0 // pred_check
    _
  $region23: #{activation_unit_forward.3} parent=0 // pred_check_branch
    %337 = sbr.rel (0) target = $region25
  $region24: #{activation_unit_forward.3} parent=0 // pred_region
    _
  $region25: #{activation_unit_forward.3} parent=0 // pred_fallthru
    _
  // Predicated region
  $region26: #{activation_unit_forward.3} parent=0 // pred_check
    _
  $region27: #{activation_unit_forward.3} parent=0 // pred_check_branch
    %339 = sbr.rel (0) target = $region29
  $region28: #{activation_unit_forward.3} parent=0 // pred_region
    _
  $region29: #{activation_unit_forward.3} parent=0 // pred_fallthru
    _
  // Predicated region
  $region30: #{activation_unit_forward.3} parent=0 // pred_check
    _
  $region31: #{activation_unit_forward.3} parent=0 // pred_check_branch
    %341 = sbr.rel (0) target = $region33
  $region32: #{activation_unit_forward.3} parent=0 // pred_region
    _
  $region33: #{activation_unit_forward.3} parent=0 // pred_fallthru
    _

// kernel: activation_unit_forward.5
$region0: #{activation_unit_forward.5}
  #allocation0 [shape = 'u32[]', space=smem, size = 0x4, offset = 0x4, fixed_abs, tag = 'smem constant byte address 0x4 - core index']
  #allocation1 [shape = 'u32[144,128]{1,0:T(1,128)}', space=vmem, size = 0x12000, scoped, tag = 'internal scratch']
  %s0 = inlined_call_operand.vmem [shape: f32[2,8], index: 0, kind: input, shape index: {}]
  %s1 = inlined_call_operand.vmem [shape: f32[2,8,16], index: 1, kind: input, shape index: {}]
  %s2 = inlined_call_operand.hbm [shape: f32[2,16], index: 2, kind: output, shape index: {}]
  %s3 = sld [smem:[#allocation0]]
  $region18: #{activation_unit_forward.5} parent=0
    _
  %s5 = ssub.s32 1, %s3
  %s6 = scalar_select 0, %s5, %s3
  $region1: #{activation_unit_forward.5} parent=0
    #allocation2 [shape = 'u8[1024]{0}', space=vmem, size = 0x400, scoped, tag = 'output window, operand 0, single buffered']
    #allocation3 [shape = 's32[1]{0}', space=sflag, size = 0x4, scoped, tag = 'scoped memory for activation_unit_forward.5']
    %7 = vsyncpa [#allocation3], 0
    // Predicated region
    $region2: #{activation_unit_forward.5} parent=1 // pred_check
      _
    $region3: #{activation_unit_forward.5} parent=1 // pred_check_branch
      %9 = sbr.rel (0) target = $region5
    $region4: #{activation_unit_forward.5} parent=1 // pred_region
      _
    $region5: #{activation_unit_forward.5} parent=1 // pred_fallthru
      _
    // Predicated region
    $region6: #{activation_unit_forward.5} parent=1 // pred_check
      _
    $region7: #{activation_unit_forward.5} parent=1 // pred_check_branch
      %11 = sbr.rel (0) target = $region9
    $region8: #{activation_unit_forward.5} parent=1 // pred_region
      _
    $region9: #{activation_unit_forward.5} parent=1 // pred_fallthru
      _
    %v12 = vld [vmem:[%s0] sm:$0x3]
    %v13 = vld [vmem:[%s1] sm:$0xff]
    %v14 = vld [vmem:[%s1 + $0x8] sm:$0xff]
    %v17 = vunpack.c.l.s4 1966171168
    %v18 = vunpack.c.0.s8 %v17
    %v19 = vlaneseq
    %v20 = vshrl.u32 %v19, 7
    %v21 = vsub.s32 %v18, %v20
    %v22 = vrot.slane %v12, %v21
    %v23 = vcombine.high %v22, %v22
    %v25 = vunpack.c.l.s4 1966171168
    %v26 = vunpack.c.0.s8 %v25
    %v27 = vlaneseq
    %v28 = vshrl.u32 %v27, 7
    %v29 = vsub.s32 %v26, %v28
    %v30 = vrot.slane %v22, %v29
    %v32 = vunpack.c.l.s4 1966171168
    %v33 = vunpack.c.0.s8 %v32
    %v34 = vlaneseq
    %v35 = vshrl.u32 %v34, 7
    %v36 = vsub.s32 %v33, %v35
    %v37 = vrot.slane %v23, %v36
    %vm38 = vcmask 64512
    %v39 = vsel %vm38, %v30, 0
    %41 = vmatprep.subr.mxu0 0.0
    %42 = vmatpush1.msra.mxu0 %v13
    %43 = vmatprep.subr.mxu0 0.0
    %44 = vmatpush1.msra.mxu0 0.0
    %45 = vmatprep.subr.mxu0 0.0
    %46 = vmatpush1.msra.mxu0 0.0
    %47 = vmatprep.subr.mxu0 0.0
    %48 = vmatpush1.msra.mxu0 0.0
    %49 = vmatprep.subr.mxu0 0.0
    %50 = vmatpush1.msra.mxu0 0.0
    %51 = vmatprep.subr.mxu0 0.0
    %52 = vmatpush1.msra.mxu0 0.0
    %53 = vmatprep.subr.mxu0 0.0
    %54 = vmatpush1.msra.mxu0 0.0
    %55 = vmatprep.subr.mxu0 0.0
    %56 = vmatpush1.msra.mxu0 0.0
    %57 = vmatprep.subr.mxu0 0.0
    %58 = vmatpush1.msra.mxu0 0.0
    %59 = vmatprep.subr.mxu0 0.0
    %60 = vmatpush1.msra.mxu0 0.0
    %61 = vmatprep.subr.mxu0 0.0
    %62 = vmatpush1.msra.mxu0 0.0
    %63 = vmatprep.subr.mxu0 0.0
    %64 = vmatpush1.msra.mxu0 0.0
    %65 = vmatprep.subr.mxu0 0.0
    %66 = vmatpush1.msra.mxu0 0.0
    %67 = vmatprep.subr.mxu0 0.0
    %68 = vmatpush1.msra.mxu0 0.0
    %69 = vmatprep.subr.mxu0 0.0
    %70 = vmatpush1.msra.mxu0 0.0
    %71 = vmatprep.subr.mxu0 0.0
    %72 = vmatpush1.msra.mxu0 0.0
    %73 = vmatprep.subr.mxu0 0.0
    %74 = vmatpush1.msra.mxu0 0.0
    %75 = vmatprep.subr.mxu0 0.0
    %76 = vmatpush1.msra.mxu0 0.0
    %77 = vmatprep.subr.mxu0 0.0
    %78 = vmatpush1.msra.mxu0 0.0
    %79 = vmatprep.subr.mxu0 0.0
    %80 = vmatpush1.msra.mxu0 0.0
    %81 = vmatprep.subr.mxu0 0.0
    %82 = vmatpush1.msra.mxu0 0.0
    %83 = vmatprep.subr.mxu0 0.0
    %84 = vmatpush1.msra.mxu0 0.0
    %85 = vmatprep.subr.mxu0 0.0
    %86 = vmatpush1.msra.mxu0 0.0
    %87 = vmatprep.subr.mxu0 0.0
    %88 = vmatpush1.msra.mxu0 0.0
    %89 = vmatprep.subr.mxu0 0.0
    %90 = vmatpush1.msra.mxu0 0.0
    %91 = vmatprep.subr.mxu0 0.0
    %92 = vmatpush1.msra.mxu0 0.0
    %93 = vmatprep.subr.mxu0 0.0
    %94 = vmatpush1.msra.mxu0 0.0
    %95 = vmatprep.subr.mxu0 0.0
    %96 = vmatpush1.msra.mxu0 0.0
    %97 = vmatprep.subr.mxu0 0.0
    %98 = vmatpush1.msra.mxu0 0.0
    %99 = vmatprep.subr.mxu0 0.0
    %100 = vmatpush1.msra.mxu0 0.0
    %101 = vmatprep.subr.mxu0 0.0
    %102 = vmatpush1.msra.mxu0 0.0
    %103 = vmatprep.subr.mxu0 0.0
    %104 = vmatpush1.msra.mxu0 0.0
    %105 = vmatprep.mubr.f32.mxu0 0.0
    %106 = vmatmul.mubr.f32.gmra.mrb[0].mxu0 %v39
    %v107 = vpop.f32.mrb[0].mxu0
    %v108 = vadd.f32 0.0, %v107
    %v109 = vpop.f32.mrb[0].mxu0
    %110 = vdwg.mxu0
    %v111 = vsel %vm38, %v37, 0
    %113 = vmatprep.subr.mxu0 0.0
    %114 = vmatpush1.msra.mxu0 %v14
    %115 = vmatprep.subr.mxu0 0.0
    %116 = vmatpush1.msra.mxu0 0.0
    %117 = vmatprep.subr.mxu0 0.0
    %118 = vmatpush1.msra.mxu0 0.0
    %119 = vmatprep.subr.mxu0 0.0
    %120 = vmatpush1.msra.mxu0 0.0
    %121 = vmatprep.subr.mxu0 0.0
    %122 = vmatpush1.msra.mxu0 0.0
    %123 = vmatprep.subr.mxu0 0.0
    %124 = vmatpush1.msra.mxu0 0.0
    %125 = vmatprep.subr.mxu0 0.0
    %126 = vmatpush1.msra.mxu0 0.0
    %127 = vmatprep.subr.mxu0 0.0
    %128 = vmatpush1.msra.mxu0 0.0
    %129 = vmatprep.subr.mxu0 0.0
    %130 = vmatpush1.msra.mxu0 0.0
    %131 = vmatprep.subr.mxu0 0.0
    %132 = vmatpush1.msra.mxu0 0.0
    %133 = vmatprep.subr.mxu0 0.0
    %134 = vmatpush1.msra.mxu0 0.0
    %135 = vmatprep.subr.mxu0 0.0
    %136 = vmatpush1.msra.mxu0 0.0
    %137 = vmatprep.subr.mxu0 0.0
    %138 = vmatpush1.msra.mxu0 0.0
    %139 = vmatprep.subr.mxu0 0.0
    %140 = vmatpush1.msra.mxu0 0.0
    %141 = vmatprep.subr.mxu0 0.0
    %142 = vmatpush1.msra.mxu0 0.0
    %143 = vmatprep.subr.mxu0 0.0
    %144 = vmatpush1.msra.mxu0 0.0
    %145 = vmatprep.subr.mxu0 0.0
    %146 = vmatpush1.msra.mxu0 0.0
    %147 = vmatprep.subr.mxu0 0.0
    %148 = vmatpush1.msra.mxu0 0.0
    %149 = vmatprep.subr.mxu0 0.0
    %150 = vmatpush1.msra.mxu0 0.0
    %151 = vmatprep.subr.mxu0 0.0
    %152 = vmatpush1.msra.mxu0 0.0
    %153 = vmatprep.subr.mxu0 0.0
    %154 = vmatpush1.msra.mxu0 0.0
    %155 = vmatprep.subr.mxu0 0.0
    %156 = vmatpush1.msra.mxu0 0.0
    %157 = vmatprep.subr.mxu0 0.0
    %158 = vmatpush1.msra.mxu0 0.0
    %159 = vmatprep.subr.mxu0 0.0
    %160 = vmatpush1.msra.mxu0 0.0
    %161 = vmatprep.subr.mxu0 0.0
    %162 = vmatpush1.msra.mxu0 0.0
    %163 = vmatprep.subr.mxu0 0.0
    %164 = vmatpush1.msra.mxu0 0.0
    %165 = vmatprep.subr.mxu0 0.0
    %166 = vmatpush1.msra.mxu0 0.0
    %167 = vmatprep.subr.mxu0 0.0
    %168 = vmatpush1.msra.mxu0 0.0
    %169 = vmatprep.subr.mxu0 0.0
    %170 = vmatpush1.msra.mxu0 0.0
    %171 = vmatprep.subr.mxu0 0.0
    %172 = vmatpush1.msra.mxu0 0.0
    %173 = vmatprep.subr.mxu0 0.0
    %174 = vmatpush1.msra.mxu0 0.0
    %175 = vmatprep.subr.mxu0 0.0
    %176 = vmatpush1.msra.mxu0 0.0
    %177 = vmatprep.mubr.f32.mxu0 0.0
    %178 = vmatmul.mubr.f32.gmra.mrb[0].mxu0 %v111
    %v179 = vpop.f32.mrb[0].mxu0
    %v180 = vadd.f32 0.0, %v179
    %v181 = vpop.f32.mrb[0].mxu0
    %182 = vdwg.mxu0
    %v185 = vrot.slane %v180, 7
    %vm186 = vcmask 1041409
    %v187 = vsel %vm186, %v185, %v108
    %vm189 = vcmask 123904
    %190 = vst.msk [vmem:[#allocation2] sm:$0x3] %vm189, %v187
    // Predicated region
    $region10: #{activation_unit_forward.5} parent=1 // pred_check
      _
    $region11: #{activation_unit_forward.5} parent=1 // pred_check_branch
      %192 = sbr.rel (0) target = $region13
    $region12: #{activation_unit_forward.5} parent=1 // pred_region
      %s194 = ssub.s32 32, 32
      %195 = vsyncadd [#allocation3], %s194
      %s197 = sshll.u32 [#allocation2], 4
      %s198 = int_to_ptr.vmem [resolvable:$true] %s197
      %200 = dma.vmem_to_hbm [thread:$0]  %s198, 32, %s2, [#allocation3]
    $region13: #{activation_unit_forward.5} parent=1 // pred_fallthru
      _
    // Predicated region
    $region14: #{activation_unit_forward.5} parent=1 // pred_check
      _
    $region15: #{activation_unit_forward.5} parent=1 // pred_check_branch
      %202 = sbr.rel (0) target = $region17
    $region16: #{activation_unit_forward.5} parent=1 // pred_region
      %203 = dma.done [#allocation3], 32
    $region17: #{activation_unit_forward.5} parent=1 // pred_fallthru
      _
    %204 = vsyncpa [#allocation3], 1

// kernel: activation_unit_forward.4
$region0: #{activation_unit_forward.4}
  #allocation0 [shape = 'u32[]', space=smem, size = 0x4, offset = 0x4, fixed_abs, tag = 'smem constant byte address 0x4 - core index']
  #allocation1 [shape = 'u32[144,128]{1,0:T(1,128)}', space=vmem, size = 0x12000, scoped, tag = 'internal scratch']
  #allocation2 [shape = 'f32[1,1]{1,0:T(1,128)S(6)}', space=smem, size = 0x200, scoped, tag = 'scoped memory for activation_unit_forward.4']
  #allocation3 [shape = 'f32[1,1]{1,0:T(1,128)S(6)}', space=smem, size = 0x200, scoped, tag = 'scoped memory for activation_unit_forward.4']
  %s0 = inlined_call_operand.vmem [shape: f32[4,64], index: 0, kind: input, shape index: {}]
  %s1 = inlined_call_operand.vmem [shape: f32[2,16], index: 1, kind: input, shape index: {}]
  %s2 = inlined_call_operand.vmem [shape: f32[64,36], index: 2, kind: input, shape index: {}]
  %s3 = inlined_call_operand.vmem [shape: f32[16,36], index: 3, kind: input, shape index: {}]
  %s4 = inlined_call_operand.vmem [shape: f32[1,36], index: 4, kind: input, shape index: {}]
  %s5 = inlined_call_operand.vmem [shape: f32[1,36], index: 5, kind: input, shape index: {}]
  %s6 = inlined_call_operand.vmem [shape: f32[1,36], index: 6, kind: input, shape index: {}]
  %s7 = inlined_call_operand.vmem [shape: f32[1,36], index: 7, kind: input, shape index: {}]
  %s8 = inlined_call_operand.<no memory space> [shape: f32[1,1], index: 8, kind: input, shape index: {}]
  %s9 = inlined_call_operand.<no memory space> [shape: f32[1,1], index: 9, kind: input, shape index: {}]
  %s10 = inlined_call_operand.vmem [shape: f32[4,4], index: 10, kind: output, shape index: {}]
  %s11 = sld [smem:[#allocation0]]
  $region50: #{activation_unit_forward.4} parent=0
    _
  %s13 = ssub.s32 1, %s11
  %s14 = scalar_select 0, %s13, %s11
  %15 = sst [smem:[#allocation2]] %s8
  %16 = sst [smem:[#allocation3]] %s9
  // Predicated region
  $region2: #{activation_unit_forward.4} parent=0 // pred_check
    _
  $region3: #{activation_unit_forward.4} parent=0 // pred_check_branch
    %18 = sbr.rel (0) target = $region5
  $region4: #{activation_unit_forward.4} parent=0 // pred_region
    _
  $region5: #{activation_unit_forward.4} parent=0 // pred_fallthru
    _
  // Predicated region
  $region6: #{activation_unit_forward.4} parent=0 // pred_check
    _
  $region7: #{activation_unit_forward.4} parent=0 // pred_check_branch
    %20 = sbr.rel (0) target = $region9
  $region8: #{activation_unit_forward.4} parent=0 // pred_region
    _
  $region9: #{activation_unit_forward.4} parent=0 // pred_fallthru
    _
  // Predicated region
  $region10: #{activation_unit_forward.4} parent=0 // pred_check
    _
  $region11: #{activation_unit_forward.4} parent=0 // pred_check_branch
    %22 = sbr.rel (0) target = $region13
  $region12: #{activation_unit_forward.4} parent=0 // pred_region
    _
  $region13: #{activation_unit_forward.4} parent=0 // pred_fallthru
    _
  // Predicated region
  $region14: #{activation_unit_forward.4} parent=0 // pred_check
    _
  $region15: #{activation_unit_forward.4} parent=0 // pred_check_branch
    %24 = sbr.rel (0) target = $region17
  $region16: #{activation_unit_forward.4} parent=0 // pred_region
    _
  $region17: #{activation_unit_forward.4} parent=0 // pred_fallthru
    _
  // Predicated region
  $region18: #{activation_unit_forward.4} parent=0 // pred_check
    _
  $region19: #{activation_unit_forward.4} parent=0 // pred_check_branch
    %26 = sbr.rel (0) target = $region21
  $region20: #{activation_unit_forward.4} parent=0 // pred_region
    _
  $region21: #{activation_unit_forward.4} parent=0 // pred_fallthru
    _
  // Predicated region
  $region22: #{activation_unit_forward.4} parent=0 // pred_check
    _
  $region23: #{activation_unit_forward.4} parent=0 // pred_check_branch
    %28 = sbr.rel (0) target = $region25
  $region24: #{activation_unit_forward.4} parent=0 // pred_region
    _
  $region25: #{activation_unit_forward.4} parent=0 // pred_fallthru
    _
  // Predicated region
  $region26: #{activation_unit_forward.4} parent=0 // pred_check
    _
  $region27: #{activation_unit_forward.4} parent=0 // pred_check_branch
    %30 = sbr.rel (0) target = $region29
  $region28: #{activation_unit_forward.4} parent=0 // pred_region
    _
  $region29: #{activation_unit_forward.4} parent=0 // pred_fallthru
    _
  // Predicated region
  $region30: #{activation_unit_forward.4} parent=0 // pred_check
    _
  $region31: #{activation_unit_forward.4} parent=0 // pred_check_branch
    %32 = sbr.rel (0) target = $region33
  $region32: #{activation_unit_forward.4} parent=0 // pred_region
    _
  $region33: #{activation_unit_forward.4} parent=0 // pred_fallthru
    _
  // Predicated region
  $region34: #{activation_unit_forward.4} parent=0 // pred_check
    _
  $region35: #{activation_unit_forward.4} parent=0 // pred_check_branch
    %34 = sbr.rel (0) target = $region37
  $region36: #{activation_unit_forward.4} parent=0 // pred_region
    _
  $region37: #{activation_unit_forward.4} parent=0 // pred_fallthru
    _
  // Predicated region
  $region38: #{activation_unit_forward.4} parent=0 // pred_check
    _
  $region39: #{activation_unit_forward.4} parent=0 // pred_check_branch
    %36 = sbr.rel (0) target = $region41
  $region40: #{activation_unit_forward.4} parent=0 // pred_region
    _
  $region41: #{activation_unit_forward.4} parent=0 // pred_fallthru
    _
  %v37 = vld [vmem:[%s1] sm:$0x3]
  %v40 = vunpack.c.l.s4 1966171168
  %v41 = vunpack.c.0.s8 %v40
  %v42 = vlaneseq
  %v43 = vshrl.u32 %v42, 7
  %v44 = vsub.s32 %v41, %v43
  %v45 = vrot.slane %v37, %v44
  %v46 = vcombine.high %v45, %v45
  %v48 = vunpack.c.l.s4 1966171168
  %v49 = vunpack.c.0.s8 %v48
  %v50 = vlaneseq
  %v51 = vshrl.u32 %v50, 7
  %v52 = vsub.s32 %v49, %v51
  %v53 = vrot.slane %v45, %v52
  %v55 = vunpack.c.l.s4 1966171168
  %v56 = vunpack.c.0.s8 %v55
  %v57 = vlaneseq
  %v58 = vshrl.u32 %v57, 7
  %v59 = vsub.s32 %v56, %v58
  %v60 = vrot.slane %v46, %v59
  %v61 = vlaneseq
  %v62 = vshrl.u32 %v61, 7
  %v63 = vsub.s32 0, %v62
  %v64 = vrot.slane %v53, %v63
  %v65 = vlaneseq
  %v66 = vshrl.u32 %v65, 7
  %v67 = vsub.s32 0, %v66
  %v68 = vrot.slane %v60, %v67
  %v69 = vld [vmem:[%s0] sm:$0xf]
  %v70 = vcombine.low %v64, %v68
  %v72 = vunpack.c.l.s4 1983009808
  %v73 = vunpack.c.0.s8 %v72
  %v74 = vlaneseq
  %v75 = vshrl.u32 %v74, 7
  %v76 = vsub.s32 %v73, %v75
  %v77 = vrot.slane %v70, %v76
  %79 = vrot.lane.b32.xlu0 %v77, 16
  %v80 = vpop.permute.xlu0 %79
  %82 = vrot.lane.b32.xlu0 %v77, 32
  %v83 = vpop.permute.xlu0 %82
  %85 = vrot.lane.b32.xlu0 %v77, 48
  %v86 = vpop.permute.xlu0 %85
  %vm88 = vcmask 130048
  %v89 = vsel %vm88, %v77, %v80
  %vm90 = vcmask 261120
  %v91 = vsel %vm90, %v89, %v83
  %vm92 = vcmask 392192
  %v93 = vsel %vm92, %v91, %v86
  %v94 = vld [vmem:[%s3] sm:$0xff]
  %v95 = vld [vmem:[%s3 + $0x8] sm:$0xff]
  %v96 = vsel %vm88, %v77, 0
  %98 = vmatprep.subr.mxu0 0.0
  %99 = vmatpush1.msra.mxu0 %v94
  %100 = vmatprep.subr.mxu0 0.0
  %101 = vmatpush1.msra.mxu0 %v95
  %102 = vmatprep.subr.mxu0 0.0
  %103 = vmatpush1.msra.mxu0 0.0
  %104 = vmatprep.subr.mxu0 0.0
  %105 = vmatpush1.msra.mxu0 0.0
  %106 = vmatprep.subr.mxu0 0.0
  %107 = vmatpush1.msra.mxu0 0.0
  %108 = vmatprep.subr.mxu0 0.0
  %109 = vmatpush1.msra.mxu0 0.0
  %110 = vmatprep.subr.mxu0 0.0
  %111 = vmatpush1.msra.mxu0 0.0
  %112 = vmatprep.subr.mxu0 0.0
  %113 = vmatpush1.msra.mxu0 0.0
  %114 = vmatprep.subr.mxu0 0.0
  %115 = vmatpush1.msra.mxu0 0.0
  %116 = vmatprep.subr.mxu0 0.0
  %117 = vmatpush1.msra.mxu0 0.0
  %118 = vmatprep.subr.mxu0 0.0
  %119 = vmatpush1.msra.mxu0 0.0
  %120 = vmatprep.subr.mxu0 0.0
  %121 = vmatpush1.msra.mxu0 0.0
  %122 = vmatprep.subr.mxu0 0.0
  %123 = vmatpush1.msra.mxu0 0.0
  %124 = vmatprep.subr.mxu0 0.0
  %125 = vmatpush1.msra.mxu0 0.0
  %126 = vmatprep.subr.mxu0 0.0
  %127 = vmatpush1.msra.mxu0 0.0
  %128 = vmatprep.subr.mxu0 0.0
  %129 = vmatpush1.msra.mxu0 0.0
  %130 = vmatprep.subr.mxu0 0.0
  %131 = vmatpush1.msra.mxu0 0.0
  %132 = vmatprep.subr.mxu0 0.0
  %133 = vmatpush1.msra.mxu0 0.0
  %134 = vmatprep.subr.mxu0 0.0
  %135 = vmatpush1.msra.mxu0 0.0
  %136 = vmatprep.subr.mxu0 0.0
  %137 = vmatpush1.msra.mxu0 0.0
  %138 = vmatprep.subr.mxu0 0.0
  %139 = vmatpush1.msra.mxu0 0.0
  %140 = vmatprep.subr.mxu0 0.0
  %141 = vmatpush1.msra.mxu0 0.0
  %142 = vmatprep.subr.mxu0 0.0
  %143 = vmatpush1.msra.mxu0 0.0
  %144 = vmatprep.subr.mxu0 0.0
  %145 = vmatpush1.msra.mxu0 0.0
  %146 = vmatprep.subr.mxu0 0.0
  %147 = vmatpush1.msra.mxu0 0.0
  %148 = vmatprep.subr.mxu0 0.0
  %149 = vmatpush1.msra.mxu0 0.0
  %150 = vmatprep.subr.mxu0 0.0
  %151 = vmatpush1.msra.mxu0 0.0
  %152 = vmatprep.subr.mxu0 0.0
  %153 = vmatpush1.msra.mxu0 0.0
  %154 = vmatprep.subr.mxu0 0.0
  %155 = vmatpush1.msra.mxu0 0.0
  %156 = vmatprep.subr.mxu0 0.0
  %157 = vmatpush1.msra.mxu0 0.0
  %158 = vmatprep.subr.mxu0 0.0
  %159 = vmatpush1.msra.mxu0 0.0
  %160 = vmatprep.subr.mxu0 0.0
  %161 = vmatpush1.msra.mxu0 0.0
  %162 = vmatprep.mubr.f32.mxu0 0.0
  %163 = vmatmul.mubr.f32.gmra.mrb[0].mxu0 %v96
  %v164 = vpop.f32.mrb[0].mxu0
  %v165 = vadd.f32 0.0, %v164
  %v166 = vpop.f32.mrb[0].mxu0
  %167 = vdwg.mxu0
  %v168 = vld [vmem:[%s2] sm:$0xff]
  %v169 = vld [vmem:[%s2 + $0x8] sm:$0xff]
  %v170 = vld [vmem:[%s2 + $0x10] sm:$0xff]
  %v171 = vld [vmem:[%s2 + $0x18] sm:$0xff]
  %v172 = vld [vmem:[%s2 + $0x20] sm:$0xff]
  %v173 = vld [vmem:[%s2 + $0x28] sm:$0xff]
  %v174 = vld [vmem:[%s2 + $0x30] sm:$0xff]
  %v175 = vld [vmem:[%s2 + $0x38] sm:$0xff]
  %vm176 = vcmask 523264
  %v178 = vsel %vm176, %v69, 0
  %180 = vmatprep.subr.mxu0 0.0
  %181 = vmatpush1.msra.mxu0 %v168
  %182 = vmatprep.subr.mxu0 0.0
  %183 = vmatpush1.msra.mxu0 %v169
  %184 = vmatprep.subr.mxu0 0.0
  %185 = vmatpush1.msra.mxu0 %v170
  %186 = vmatprep.subr.mxu0 0.0
  %187 = vmatpush1.msra.mxu0 %v171
  %188 = vmatprep.subr.mxu0 0.0
  %189 = vmatpush1.msra.mxu0 %v172
  %190 = vmatprep.subr.mxu0 0.0
  %191 = vmatpush1.msra.mxu0 %v173
  %192 = vmatprep.subr.mxu0 0.0
  %193 = vmatpush1.msra.mxu0 %v174
  %194 = vmatprep.subr.mxu0 0.0
  %195 = vmatpush1.msra.mxu0 %v175
  %196 = vmatprep.subr.mxu0 0.0
  %197 = vmatpush1.msra.mxu0 0.0
  %198 = vmatprep.subr.mxu0 0.0
  %199 = vmatpush1.msra.mxu0 0.0
  %200 = vmatprep.subr.mxu0 0.0
  %201 = vmatpush1.msra.mxu0 0.0
  %202 = vmatprep.subr.mxu0 0.0
  %203 = vmatpush1.msra.mxu0 0.0
  %204 = vmatprep.subr.mxu0 0.0
  %205 = vmatpush1.msra.mxu0 0.0
  %206 = vmatprep.subr.mxu0 0.0
  %207 = vmatpush1.msra.mxu0 0.0
  %208 = vmatprep.subr.mxu0 0.0
  %209 = vmatpush1.msra.mxu0 0.0
  %210 = vmatprep.subr.mxu0 0.0
  %211 = vmatpush1.msra.mxu0 0.0
  %212 = vmatprep.subr.mxu0 0.0
  %213 = vmatpush1.msra.mxu0 0.0
  %214 = vmatprep.subr.mxu0 0.0
  %215 = vmatpush1.msra.mxu0 0.0
  %216 = vmatprep.subr.mxu0 0.0
  %217 = vmatpush1.msra.mxu0 0.0
  %218 = vmatprep.subr.mxu0 0.0
  %219 = vmatpush1.msra.mxu0 0.0
  %220 = vmatprep.subr.mxu0 0.0
  %221 = vmatpush1.msra.mxu0 0.0
  %222 = vmatprep.subr.mxu0 0.0
  %223 = vmatpush1.msra.mxu0 0.0
  %224 = vmatprep.subr.mxu0 0.0
  %225 = vmatpush1.msra.mxu0 0.0
  %226 = vmatprep.subr.mxu0 0.0
  %227 = vmatpush1.msra.mxu0 0.0
  %228 = vmatprep.subr.mxu0 0.0
  %229 = vmatpush1.msra.mxu0 0.0
  %230 = vmatprep.subr.mxu0 0.0
  %231 = vmatpush1.msra.mxu0 0.0
  %232 = vmatprep.subr.mxu0 0.0
  %233 = vmatpush1.msra.mxu0 0.0
  %234 = vmatprep.subr.mxu0 0.0
  %235 = vmatpush1.msra.mxu0 0.0
  %236 = vmatprep.subr.mxu0 0.0
  %237 = vmatpush1.msra.mxu0 0.0
  %238 = vmatprep.subr.mxu0 0.0
  %239 = vmatpush1.msra.mxu0 0.0
  %240 = vmatprep.subr.mxu0 0.0
  %241 = vmatpush1.msra.mxu0 0.0
  %242 = vmatprep.subr.mxu0 0.0
  %243 = vmatpush1.msra.mxu0 0.0
  %244 = vmatprep.mubr.f32.mxu0 0.0
  %245 = vmatmul.mubr.f32.gmra.mrb[0].mxu0 %v178
  %v246 = vpop.f32.mrb[0].mxu0
  %v247 = vadd.f32 0.0, %v246
  %v248 = vpop.f32.mrb[0].mxu0
  %249 = vdwg.mxu0
  %v250 = vmul.f32 %v93, %v69
  %v252 = vsel %vm176, %v250, 0
  %254 = vmatprep.subr.mxu0 0.0
  %255 = vmatpush1.msra.mxu0 %v168
  %256 = vmatprep.subr.mxu0 0.0
  %257 = vmatpush1.msra.mxu0 %v169
  %258 = vmatprep.subr.mxu0 0.0
  %259 = vmatpush1.msra.mxu0 %v170
  %260 = vmatprep.subr.mxu0 0.0
  %261 = vmatpush1.msra.mxu0 %v171
  %262 = vmatprep.subr.mxu0 0.0
  %263 = vmatpush1.msra.mxu0 %v172
  %264 = vmatprep.subr.mxu0 0.0
  %265 = vmatpush1.msra.mxu0 %v173
  %266 = vmatprep.subr.mxu0 0.0
  %267 = vmatpush1.msra.mxu0 %v174
  %268 = vmatprep.subr.mxu0 0.0
  %269 = vmatpush1.msra.mxu0 %v175
  %270 = vmatprep.subr.mxu0 0.0
  %271 = vmatpush1.msra.mxu0 0.0
  %272 = vmatprep.subr.mxu0 0.0
  %273 = vmatpush1.msra.mxu0 0.0
  %274 = vmatprep.subr.mxu0 0.0
  %275 = vmatpush1.msra.mxu0 0.0
  %276 = vmatprep.subr.mxu0 0.0
  %277 = vmatpush1.msra.mxu0 0.0
  %278 = vmatprep.subr.mxu0 0.0
  %279 = vmatpush1.msra.mxu0 0.0
  %280 = vmatprep.subr.mxu0 0.0
  %281 = vmatpush1.msra.mxu0 0.0
  %282 = vmatprep.subr.mxu0 0.0
  %283 = vmatpush1.msra.mxu0 0.0
  %284 = vmatprep.subr.mxu0 0.0
  %285 = vmatpush1.msra.mxu0 0.0
  %286 = vmatprep.subr.mxu0 0.0
  %287 = vmatpush1.msra.mxu0 0.0
  %288 = vmatprep.subr.mxu0 0.0
  %289 = vmatpush1.msra.mxu0 0.0
  %290 = vmatprep.subr.mxu0 0.0
  %291 = vmatpush1.msra.mxu0 0.0
  %292 = vmatprep.subr.mxu0 0.0
  %293 = vmatpush1.msra.mxu0 0.0
  %294 = vmatprep.subr.mxu0 0.0
  %295 = vmatpush1.msra.mxu0 0.0
  %296 = vmatprep.subr.mxu0 0.0
  %297 = vmatpush1.msra.mxu0 0.0
  %298 = vmatprep.subr.mxu0 0.0
  %299 = vmatpush1.msra.mxu0 0.0
  %300 = vmatprep.subr.mxu0 0.0
  %301 = vmatpush1.msra.mxu0 0.0
  %302 = vmatprep.subr.mxu0 0.0
  %303 = vmatpush1.msra.mxu0 0.0
  %304 = vmatprep.subr.mxu0 0.0
  %305 = vmatpush1.msra.mxu0 0.0
  %306 = vmatprep.subr.mxu0 0.0
  %307 = vmatpush1.msra.mxu0 0.0
  %308 = vmatprep.subr.mxu0 0.0
  %309 = vmatpush1.msra.mxu0 0.0
  %310 = vmatprep.subr.mxu0 0.0
  %311 = vmatpush1.msra.mxu0 0.0
  %312 = vmatprep.subr.mxu0 0.0
  %313 = vmatpush1.msra.mxu0 0.0
  %314 = vmatprep.subr.mxu0 0.0
  %315 = vmatpush1.msra.mxu0 0.0
  %316 = vmatprep.subr.mxu0 0.0
  %317 = vmatpush1.msra.mxu0 0.0
  %318 = vmatprep.mubr.f32.mxu0 0.0
  %319 = vmatmul.mubr.f32.gmra.mrb[0].mxu0 %v252
  %v320 = vpop.f32.mrb[0].mxu0
  %v321 = vadd.f32 0.0, %v320
  %v322 = vpop.f32.mrb[0].mxu0
  %323 = vdwg.mxu0
  %v324 = vld [vmem:[%s4] sm:$0x1]
  %v325 = vld [vmem:[%s5] sm:$0x1]
  %v326 = vld [vmem:[%s6] sm:$0x1]
  %v327 = vld [vmem:[%s7] sm:$0x1]
  %s328 = sld [smem:[#allocation2]]
  %s329 = sld [smem:[#allocation3]]
  %v330 = vsub.f32 %v165, %v247
  %v332 = vlaneseq
  %v333 = vshrl.u32 %v332, 7
  %v334 = vsub.s32 0, %v333
  %v335 = vrot.slane %v325, %v334
  %v337 = vsub.f32 %v165, %v335
  %v339 = vlaneseq
  %v340 = vshrl.u32 %v339, 7
  %v341 = vsub.s32 0, %v340
  %v342 = vrot.slane %v326, %v341
  %v344 = vmul.f32 %v337, %v342
  %v345 = vxor.u32 %v344, 2147483648
  %v346 = vmul.f32 %v345, 1.442695
  %v347 = vpow.pop %v346
  %v348 = vadd.f32 %v347, 1.0
  %v349 = vrcp.pop %v348
  %v350 = vmul.f32 1.0, %v349
  %v351 = vsub.f32 1.0, %v350
  %v352 = vstv %s328
  %v353 = vmul.f32 %v352, %v351
  %v354 = vadd.f32 %v350, %v353
  %v356 = vlaneseq
  %v357 = vshrl.u32 %v356, 7
  %v358 = vsub.s32 0, %v357
  %v359 = vrot.slane %v324, %v358
  %v361 = vadd.f32 %v165, %v359
  %v362 = vmul.f32 %v354, %v361
  %v364 = vlaneseq
  %v365 = vshrl.u32 %v364, 7
  %v366 = vsub.s32 0, %v365
  %v367 = vrot.slane %v327, %v366
  %v369 = vmul.f32 %v362, %v367
  %vm370 = vcmask 289792
  %v371 = vsel %vm370, %v369, 0.0
  %372 = vadd.xlane.f32.xlu0 %v371
  %v373 = vpop.xlane.xlu0 %372
  %v374 = vstv %s329
  %v375 = vadd.f32 %v373, %v374
  %v376 = vsub.f32 %v247, %v335
  %v377 = vmul.f32 %v376, %v342
  %v378 = vxor.u32 %v377, 2147483648
  %v379 = vmul.f32 %v378, 1.442695
  %v380 = vpow.pop %v379
  %v381 = vadd.f32 %v380, 1.0
  %v382 = vrcp.pop %v381
  %v383 = vmul.f32 1.0, %v382
  %v384 = vsub.f32 1.0, %v383
  %v385 = vmul.f32 %v352, %v384
  %v386 = vadd.f32 %v383, %v385
  %v387 = vadd.f32 %v247, %v359
  %v388 = vmul.f32 %v386, %v387
  %v389 = vmul.f32 %v388, %v367
  %v390 = vsel %vm370, %v389, 0.0
  %391 = vadd.xlane.f32.xlu0 %v390
  %v392 = vpop.xlane.xlu0 %391
  %v393 = vadd.f32 %v392, %v374
  %v394 = vsub.f32 %v330, %v335
  %v395 = vmul.f32 %v394, %v342
  %v396 = vxor.u32 %v395, 2147483648
  %v397 = vmul.f32 %v396, 1.442695
  %v398 = vpow.pop %v397
  %v399 = vadd.f32 %v398, 1.0
  %v400 = vrcp.pop %v399
  %v401 = vmul.f32 1.0, %v400
  %v402 = vsub.f32 1.0, %v401
  %v403 = vmul.f32 %v352, %v402
  %v404 = vadd.f32 %v401, %v403
  %v405 = vadd.f32 %v330, %v359
  %v406 = vmul.f32 %v404, %v405
  %v407 = vmul.f32 %v406, %v367
  %v408 = vsel %vm370, %v407, 0.0
  %409 = vadd.xlane.f32.xlu0 %v408
  %v410 = vpop.xlane.xlu0 %409
  %v411 = vadd.f32 %v410, %v374
  %v412 = vsub.f32 %v321, %v335
  %v413 = vmul.f32 %v412, %v342
  %v414 = vxor.u32 %v413, 2147483648
  %v415 = vmul.f32 %v414, 1.442695
  %v416 = vpow.pop %v415
  %v417 = vadd.f32 %v416, 1.0
  %v418 = vrcp.pop %v417
  %v419 = vmul.f32 1.0, %v418
  %v420 = vsub.f32 1.0, %v419
  %v421 = vmul.f32 %v352, %v420
  %v422 = vadd.f32 %v419, %v421
  %v423 = vadd.f32 %v321, %v359
  %v424 = vmul.f32 %v422, %v423
  %v425 = vmul.f32 %v424, %v367
  %v426 = vsel %vm370, %v425, 0.0
  %427 = vadd.xlane.f32.xlu0 %v426
  %v428 = vpop.xlane.xlu0 %427
  %v429 = vadd.f32 %v428, %v374
  %vm430 = vcmask 7168
  %v431 = vsel %vm430, %v375, %v393
  %vm432 = vcmask 15360
  %v433 = vsel %vm432, %v431, %v411
  %vm434 = vcmask 23552
  %v435 = vsel %vm434, %v433, %v429
  %vm436 = vcmask 27648
  %437 = vst.msk [vmem:[%s10] sm:$0xf] %vm436, %v435
  // Predicated region
  $region42: #{activation_unit_forward.4} parent=0 // pred_check
    _
  $region43: #{activation_unit_forward.4} parent=0 // pred_check_branch
    %439 = sbr.rel (0) target = $region45
  $region44: #{activation_unit_forward.4} parent=0 // pred_region
    _
  $region45: #{activation_unit_forward.4} parent=0 // pred_fallthru
    _
  // Predicated region
  $region46: #{activation_unit_forward.4} parent=0 // pred_check
    _
  $region47: #{activation_unit_forward.4} parent=0 // pred_check_branch
    %441 = sbr.rel (0) target = $region49
  $region48: #{activation_unit_forward.4} parent=0 // pred_region
    _
  $region49: #{activation_unit_forward.4} parent=0 // pred_fallthru
    _

</llo_original>
